<compile_context>
chip_gen: v7x
topology: tpu7x:2x2x1
jax: 0.10.0
libtpu: 0.0.40
codegen_flags: <defaults>
</compile_context>

<pallas_src>
import math
from functools import partial

import jax
import jax.numpy as jnp
from jax.experimental import pallas as pl
from jax.experimental.pallas import tpu as pltpu


# ----------------------------- config (small) -----------------------------
B = 2          # batch
S = 8          # sequence length
H = 32         # hidden size
NH = 4         # attention heads
DH = H // NH   # head dim
I = 64         # intermediate (FFN) size
VOCAB = 100
N_LAYERS = 2
LN_EPS = 1e-12  # BERT LayerNorm eps
D3 = 3 * H     # fused QKV width (also the packed-vector lane width)


# ------------------------------ kernel helpers -----------------------------
def _gelu(x):
    # TODO(synk): HF BERT uses erf-based GELU; tanh approximation used here
    # (maps onto the EUP tanh unit), tiny numerical deviation.
    c = math.sqrt(2.0 / math.pi)
    return 0.5 * x * (1.0 + jnp.tanh(c * (x + 0.044715 * x * x * x)))


def _layernorm(x, g, b):
    mu = jnp.mean(x, axis=-1, keepdims=True)
    d = x - mu
    var = jnp.mean(d * d, axis=-1, keepdims=True)
    return d * jax.lax.rsqrt(var + LN_EPS) * g + b


# ------------------------------ fused encoder ------------------------------
# Packed per-layer vector rows (all padded to 3H lanes):
#   0: bqkv (3H, Q part pre-scaled)   4: bi  (I)
#   1: bo   (H)                       5: bo2 (H)
#   2: ln1_g(H)                       6: ln2_g(H)
#   3: ln1_b(H)                       7: ln2_b(H)
def _encoder_kernel(emb_ref, wqkv_ref, wo_ref, wi_ref, wo2_ref, vec_ref,
                    cls_ref, h_ref,
                    *, seq, hidden, inter, n_heads, head_dim, n_layers):
    layer = pl.program_id(1)

    # Layer 0: load the (already LayerNorm'd) embedding block into VMEM state.
    @pl.when(layer == 0)
    def _():
        h_ref[...] = emb_ref[...]

    h = h_ref[...]                                        # [S, H] f32
    vec = vec_ref[...]                                    # [8, 3H] f32
    h16 = h.astype(jnp.bfloat16)

    # ---- self attention: fused QKV projection (one [H, 3H] bf16 matmul) ----
    qkv = jnp.dot(h16, wqkv_ref[...],
                  preferred_element_type=jnp.float32) + vec[0:1, :]  # [S, 3H]

    q = qkv[:, :hidden].reshape(seq, n_heads, head_dim).astype(jnp.bfloat16)
    k = qkv[:, hidden:2 * hidden].reshape(seq, n_heads,
                                          head_dim).astype(jnp.bfloat16)
    v = qkv[:, 2 * hidden:].reshape(seq, n_heads,
                                    head_dim).astype(jnp.bfloat16)

    # TODO(synk): no attention mask — inputs are assumed unpadded (single
    # segment), matching this synthetic setup.
    # Batched over heads: one MXU contraction per einsum instead of per-head.
    s = jnp.einsum('qhd,khd->hqk', q, k,
                   preferred_element_type=jnp.float32)    # [NH, S, S]
    m = jnp.max(s, axis=-1, keepdims=True)
    p = jnp.exp(s - m)
    p = p * pl.reciprocal(jnp.sum(p, axis=-1, keepdims=True), approx=True)

    ctx = jnp.einsum('hqk,khd->qhd', p.astype(jnp.bfloat16), v,
                     preferred_element_type=jnp.float32)  # [S, NH, DH]
    ctx = ctx.reshape(seq, hidden)

    attn = jnp.dot(ctx.astype(jnp.bfloat16), wo_ref[...],
                   preferred_element_type=jnp.float32) + vec[1:2, :hidden]
    h = _layernorm(attn + h, vec[2:3, :hidden], vec[3:4, :hidden])

    # ---- feed forward ----
    ff = jnp.dot(h.astype(jnp.bfloat16), wi_ref[...],
                 preferred_element_type=jnp.float32) + vec[4:5, :inter]
    ff = _gelu(ff)
    ffn = jnp.dot(ff.astype(jnp.bfloat16), wo2_ref[...],
                  preferred_element_type=jnp.float32) + vec[5:6, :hidden]
    h = _layernorm(ffn + h, vec[6:7, :hidden], vec[7:8, :hidden])

    h_ref[...] = h                                        # stay VMEM-resident

    # Only the CLS row of this batch element ever hits HBM.
    @pl.when(layer == n_layers - 1)
    def _():
        cls_ref[...] = h[0:1, :]


# --------------------------- parameter construction ------------------------
def init_params(key):
    def nrm(k, shape, scale=0.02):
        return scale * jax.random.normal(k, shape, dtype=jnp.float32)

    keys = jax.random.split(key, 8)

    # Fused QKV weight; fold 1/sqrt(head_dim) into the Q columns.
    wqkv = nrm(keys[3], (N_LAYERS, H, D3))
    scale = 1.0 / math.sqrt(DH)
    wqkv = wqkv.at[:, :, :H].multiply(scale)

    bqkv = jnp.zeros((N_LAYERS, D3), jnp.float32)
    bqkv = bqkv.at[:, :H].multiply(scale)      # keep scale fold consistent

    def pad3h(x):
        return jnp.pad(x, ((0, 0), (0, D3 - x.shape[-1])))

    # Pack the 8 small per-layer vectors into one [L, 8, 3H] array.
    packed_vec = jnp.stack(
        [bqkv,
         pad3h(jnp.zeros((N_LAYERS, H), jnp.float32)),   # bo
         pad3h(jnp.ones((N_LAYERS, H), jnp.float32)),    # ln1_g
         pad3h(jnp.zeros((N_LAYERS, H), jnp.float32)),   # ln1_b
         pad3h(jnp.zeros((N_LAYERS, I), jnp.float32)),   # bi
         pad3h(jnp.zeros((N_LAYERS, H), jnp.float32)),   # bo2
         pad3h(jnp.ones((N_LAYERS, H), jnp.float32)),    # ln2_g
         pad3h(jnp.zeros((N_LAYERS, H), jnp.float32))],  # ln2_b
        axis=1)                                          # [L, 8, 3H]

    return {
        "word_emb": nrm(keys[0], (VOCAB, H)),
        "pos_emb": nrm(keys[1], (S, H)),
        "type_emb": nrm(keys[2], (2, H)),
        "emb_ln_g": jnp.ones((1, H), jnp.float32),
        "emb_ln_b": jnp.zeros((1, H), jnp.float32),
        # bf16 weights for the MXU (f32 accumulation in-kernel).
        "wqkv": wqkv.astype(jnp.bfloat16),
        "wo": nrm(keys[4], (N_LAYERS, H, H)).astype(jnp.bfloat16),
        "wi": nrm(keys[5], (N_LAYERS, H, I)).astype(jnp.bfloat16),
        "wo2": nrm(keys[6], (N_LAYERS, I, H)).astype(jnp.bfloat16),
        "vec": packed_vec,
    }


# --------------------------------- forward ---------------------------------
def text_encoder_forward(params, token_ids):
    """token_ids: [B, S] int32 -> CLS hidden state [B, H] float32."""
    Bt, St = token_ids.shape

    # Embedding lookup + sum + embedding LayerNorm: cheap JAX glue (gather has
    # no efficient tiny-kernel form); keeps the streamed in_specs lean.
    word = params["word_emb"][token_ids]                       # [B, S, H]
    pos = params["pos_emb"][jnp.arange(St)][None, :, :]        # [1, S, H]
    typ = params["type_emb"][0][None, None, :]                 # [1, 1, H]
    emb = word + pos + typ                                     # [B, S, H]
    emb = _layernorm(emb, params["emb_ln_g"], params["emb_ln_b"])

    def per_layer(shape):
        # leading layer axis squeezed out; block index driven by grid axis 1.
        return pl.BlockSpec((None,) + shape, lambda b, l: (l, 0, 0))

    kernel = partial(_encoder_kernel, seq=St, hidden=H, inter=I,
                     n_heads=NH, head_dim=DH, n_layers=N_LAYERS)

    # TODO(synk): at toy size (H=32) the output is lane-sparse (<128 lanes);
    # at real BERT-base (H=768) the layout is already lane-dense.
    out = pl.pallas_call(
        kernel,
        out_shape=jax.ShapeDtypeStruct((Bt, 1, H), jnp.float32),
        grid_spec=pltpu.PrefetchScalarGridSpec(
            num_scalar_prefetch=0,
            grid=(Bt, N_LAYERS),
            in_specs=[
                pl.BlockSpec((None, St, H), lambda b, l: (b, 0, 0)),  # emb
                per_layer((H, D3)),       # wqkv (bf16)
                per_layer((H, H)),        # wo   (bf16)
                per_layer((H, I)),        # wi   (bf16)
                per_layer((I, H)),        # wo2  (bf16)
                per_layer((8, D3)),       # packed biases / LN params
            ],
            out_specs=pl.BlockSpec((None, 1, H), lambda b, l: (b, 0, 0)),
            scratch_shapes=[pltpu.VMEM((St, H), jnp.float32)],
        ),
        compiler_params=pltpu.CompilerParams(
            dimension_semantics=("parallel", "arbitrary"),
            vmem_limit_bytes=64 * 1024 * 1024),
    )(emb, params["wqkv"], params["wo"], params["wi"], params["wo2"],
      params["vec"])

    return out.reshape(Bt, H)


# ----------------------------------- main -----------------------------------
if __name__ == "__main__":
    key = jax.random.PRNGKey(0)
    k_param, k_ids = jax.random.split(key)

    params = init_params(k_param)
    token_ids = jax.random.randint(k_ids, (B, S), minval=0, maxval=VOCAB,
                                   dtype=jnp.int32)

    out = text_encoder_forward(params, token_ids)
    out = jax.block_until_ready(out)

    assert out.shape == (B, H), out.shape
    assert out.dtype == jnp.float32
    assert bool(jnp.all(jnp.isfinite(out)))
    print("KERNEL_OK")
</pallas_src>

<mosaic_0001>
module attributes {stable_mosaic.version = 11 : i64} {
  func.func @_encoder_kernel(%arg0: i32, %arg1: i32, %arg2: memref<1x8x32xf32, #tpu.memory_space<vmem>>, %arg3: memref<1x32x96xbf16, #tpu.memory_space<vmem>>, %arg4: memref<1x32x32xbf16, #tpu.memory_space<vmem>>, %arg5: memref<1x32x64xbf16, #tpu.memory_space<vmem>>, %arg6: memref<1x64x32xbf16, #tpu.memory_space<vmem>>, %arg7: memref<1x8x96xf32, #tpu.memory_space<vmem>>, %arg8: memref<1x1x32xf32, #tpu.memory_space<vmem>>, %arg9: memref<8x32xf32, #tpu.memory_space<vmem>>) attributes {dimension_semantics = [#tpu.dimension_semantics<parallel>, #tpu.dimension_semantics<arbitrary>], iteration_bounds = array<i64: 2, 2>, scalar_prefetch = 0 : i64, scratch_operands = 1 : i64, tpu.core_type = #tpu.core_type<tc>, window_params = [{transform_indices = @transform_0, window_bounds = array<i64: 1, 8, 32>}, {transform_indices = @transform_1, window_bounds = array<i64: 1, 32, 96>}, {transform_indices = @transform_2, window_bounds = array<i64: 1, 32, 32>}, {transform_indices = @transform_3, window_bounds = array<i64: 1, 32, 64>}, {transform_indices = @transform_4, window_bounds = array<i64: 1, 64, 32>}, {transform_indices = @transform_5, window_bounds = array<i64: 1, 8, 96>}, {transform_indices = @transform_6, window_bounds = array<i64: 1, 1, 32>}]} {
    %c0_i32 = arith.constant 0 : i32
    %0 = arith.cmpi eq, %arg1, %c0_i32 : i32
    %1 = arith.extui %0 : i1 to i32
    %c0_i32_0 = arith.constant 0 : i32
    %2 = arith.cmpi ne, %1, %c0_i32_0 : i32
    scf.if %2 {
      %c0_41 = arith.constant 0 : index
      %c0_42 = arith.constant 0 : index
      %c0_43 = arith.constant 0 : index
      %121 = vector.load %arg2[%c0_41, %c0_42, %c0_43] : memref<1x8x32xf32, #tpu.memory_space<vmem>>, vector<1x8x32xf32>
      %122 = vector.shape_cast %121 : vector<1x8x32xf32> to vector<8x32xf32>
      %c0_44 = arith.constant 0 : index
      %c0_45 = arith.constant 0 : index
      %123 = vector.load %arg9[%c0_44, %c0_45] : memref<8x32xf32, #tpu.memory_space<vmem>>, vector<8x32xf32>
      tpu.vector_store %arg9[%c0_44, %c0_45], %122 {strides = array<i32>} : memref<8x32xf32, #tpu.memory_space<vmem>>, vector<8x32xf32>,
    } else {
    }
    %c0 = arith.constant 0 : index
    %c0_1 = arith.constant 0 : index
    %3 = vector.load %arg9[%c0, %c0_1] : memref<8x32xf32, #tpu.memory_space<vmem>>, vector<8x32xf32>
    %c0_2 = arith.constant 0 : index
    %c0_3 = arith.constant 0 : index
    %c0_4 = arith.constant 0 : index
    %4 = vector.load %arg7[%c0_2, %c0_3, %c0_4] : memref<1x8x96xf32, #tpu.memory_space<vmem>>, vector<1x8x96xf32>
    %5 = vector.shape_cast %4 : vector<1x8x96xf32> to vector<8x96xf32>
    %6 = arith.truncf %3 : vector<8x32xf32> to vector<8x32xbf16>
    %c0_5 = arith.constant 0 : index
    %c0_6 = arith.constant 0 : index
    %c0_7 = arith.constant 0 : index
    %7 = vector.load %arg3[%c0_5, %c0_6, %c0_7] : memref<1x32x96xbf16, #tpu.memory_space<vmem>>, vector<1x32x96xbf16>
    %8 = vector.shape_cast %7 : vector<1x32x96xbf16> to vector<32x96xbf16>
    %cst = arith.constant dense<0.000000e+00> : vector<8x96xf32>
    %9 = tpu.matmul %6, %8, %cst {dimension_numbers = #tpu.dot_dimension_numbers<[1], [0], [0], [1], [0, 0, 1, 1], [], []>} : vector<8x32xbf16>, vector<32x96xbf16>, vector<8x96xf32> -> vector<8x96xf32>
    %10 = vector.extract_strided_slice %5 {offsets = [0, 0], sizes = [1, 96], strides = [1, 1]} : vector<8x96xf32> to vector<1x96xf32>
    %11 = vector.broadcast %10 : vector<1x96xf32> to vector<8x96xf32>
    %12 = arith.addf %9, %11 : vector<8x96xf32>
    %13 = vector.extract_strided_slice %12 {offsets = [0, 0], sizes = [8, 32], strides = [1, 1]} : vector<8x96xf32> to vector<8x32xf32>
    %14 = vector.shape_cast %13 : vector<8x32xf32> to vector<8x4x8xf32>
    %15 = arith.truncf %14 : vector<8x4x8xf32> to vector<8x4x8xbf16>
    %16 = vector.extract_strided_slice %12 {offsets = [0, 32], sizes = [8, 32], strides = [1, 1]} : vector<8x96xf32> to vector<8x32xf32>
    %17 = vector.shape_cast %16 : vector<8x32xf32> to vector<8x4x8xf32>
    %18 = arith.truncf %17 : vector<8x4x8xf32> to vector<8x4x8xbf16>
    %19 = vector.extract_strided_slice %12 {offsets = [0, 64], sizes = [8, 32], strides = [1, 1]} : vector<8x96xf32> to vector<8x32xf32>
    %20 = vector.shape_cast %19 : vector<8x32xf32> to vector<8x4x8xf32>
    %21 = arith.truncf %20 : vector<8x4x8xf32> to vector<8x4x8xbf16>
    "tpu.trace_start"() <{level = 10 : i32, message = "qhd,khd->hqk"}> : () -> ()
    %cst_8 = arith.constant dense<0.000000e+00> : vector<4x8x8xf32>
    %22 = tpu.matmul %15, %18, %cst_8 {dimension_numbers = #tpu.dot_dimension_numbers<[2], [2], [0], [0], [0, 1, 0, 0, 1, 0], [1], [1]>} : vector<8x4x8xbf16>, vector<8x4x8xbf16>, vector<4x8x8xf32> -> vector<4x8x8xf32>
    "tpu.trace_stop"() : () -> ()
    %cst_9 = arith.constant dense<0xFF800000> : vector<4x8xf32>
    %23 = vector.multi_reduction <maximumf>, %22, %cst_9 [2] : vector<4x8x8xf32> to vector<4x8xf32>
    %24 = vector.shape_cast %23 : vector<4x8xf32> to vector<4x8x1xf32>
    %25 = vector.broadcast %24 : vector<4x8x1xf32> to vector<4x8x8xf32>
    %26 = arith.subf %22, %25 : vector<4x8x8xf32>
    %27 = math.exp %26 : vector<4x8x8xf32>
    %cst_10 = arith.constant dense<0.000000e+00> : vector<4x8xf32>
    %28 = vector.multi_reduction <add>, %27, %cst_10 [2] : vector<4x8x8xf32> to vector<4x8xf32>
    %29 = vector.shape_cast %28 : vector<4x8xf32> to vector<4x8x1xf32>
    %30 = tpu.reciprocal %29 {approx = true} : vector<4x8x1xf32> -> vector<4x8x1xf32>
    %31 = vector.broadcast %30 : vector<4x8x1xf32> to vector<4x8x8xf32>
    %32 = arith.mulf %27, %31 : vector<4x8x8xf32>
    %33 = arith.truncf %32 : vector<4x8x8xf32> to vector<4x8x8xbf16>
    "tpu.trace_start"() <{level = 10 : i32, message = "hqk,khd->qhd"}> : () -> ()
    %cst_11 = arith.constant dense<0.000000e+00> : vector<4x8x8xf32>
    %34 = tpu.matmul %21, %33, %cst_11 {dimension_numbers = #tpu.dot_dimension_numbers<[0], [2], [2], [1], [0, 1, 0, 2, 1, 1], [1], [0]>} : vector<8x4x8xbf16>, vector<4x8x8xbf16>, vector<4x8x8xf32> -> vector<4x8x8xf32>
    %35 = tpu.transpose %34, [2, 0, 1] : vector<4x8x8xf32> -> vector<8x4x8xf32>
    "tpu.trace_stop"() : () -> ()
    %36 = vector.shape_cast %35 : vector<8x4x8xf32> to vector<8x32xf32>
    %37 = arith.truncf %36 : vector<8x32xf32> to vector<8x32xbf16>
    %c0_12 = arith.constant 0 : index
    %c0_13 = arith.constant 0 : index
    %c0_14 = arith.constant 0 : index
    %38 = vector.load %arg4[%c0_12, %c0_13, %c0_14] : memref<1x32x32xbf16, #tpu.memory_space<vmem>>, vector<1x32x32xbf16>
    %39 = vector.shape_cast %38 : vector<1x32x32xbf16> to vector<32x32xbf16>
    %cst_15 = arith.constant dense<0.000000e+00> : vector<8x32xf32>
    %40 = tpu.matmul %37, %39, %cst_15 {dimension_numbers = #tpu.dot_dimension_numbers<[1], [0], [0], [1], [0, 0, 1, 1], [], []>} : vector<8x32xbf16>, vector<32x32xbf16>, vector<8x32xf32> -> vector<8x32xf32>
    %41 = vector.extract_strided_slice %5 {offsets = [1, 0], sizes = [1, 32], strides = [1, 1]} : vector<8x96xf32> to vector<1x32xf32>
    %42 = vector.broadcast %41 : vector<1x32xf32> to vector<8x32xf32>
    %43 = arith.addf %40, %42 : vector<8x32xf32>
    %44 = arith.addf %43, %3 : vector<8x32xf32>
    %45 = vector.extract_strided_slice %5 {offsets = [2, 0], sizes = [1, 32], strides = [1, 1]} : vector<8x96xf32> to vector<1x32xf32>
    %46 = vector.extract_strided_slice %5 {offsets = [3, 0], sizes = [1, 32], strides = [1, 1]} : vector<8x96xf32> to vector<1x32xf32>
    %cst_16 = arith.constant dense<0.000000e+00> : vector<8xf32>
    %47 = vector.multi_reduction <add>, %44, %cst_16 [1] : vector<8x32xf32> to vector<8xf32>
    %48 = vector.shape_cast %47 : vector<8xf32> to vector<8x1xf32>
    %cst_17 = arith.constant 3.200000e+01 : f32
    %49 = vector.broadcast %cst_17 : f32 to vector<8x1xf32>
    %50 = arith.divf %48, %49 : vector<8x1xf32>
    %51 = vector.broadcast %50 : vector<8x1xf32> to vector<8x32xf32>
    %52 = arith.subf %44, %51 : vector<8x32xf32>
    %53 = arith.mulf %52, %52 : vector<8x32xf32>
    %cst_18 = arith.constant dense<0.000000e+00> : vector<8xf32>
    %54 = vector.multi_reduction <add>, %53, %cst_18 [1] : vector<8x32xf32> to vector<8xf32>
    %55 = vector.shape_cast %54 : vector<8xf32> to vector<8x1xf32>
    %cst_19 = arith.constant 3.200000e+01 : f32
    %56 = vector.broadcast %cst_19 : f32 to vector<8x1xf32>
    %57 = arith.divf %55, %56 : vector<8x1xf32>
    %cst_20 = arith.constant 9.99999996E-13 : f32
    %58 = vector.broadcast %cst_20 : f32 to vector<8x1xf32>
    %59 = arith.addf %57, %58 : vector<8x1xf32>
    %60 = math.rsqrt %59 : vector<8x1xf32>
    %61 = vector.broadcast %60 : vector<8x1xf32> to vector<8x32xf32>
    %62 = arith.mulf %52, %61 : vector<8x32xf32>
    %63 = vector.broadcast %45 : vector<1x32xf32> to vector<8x32xf32>
    %64 = arith.mulf %62, %63 : vector<8x32xf32>
    %65 = vector.broadcast %46 : vector<1x32xf32> to vector<8x32xf32>
    %66 = arith.addf %64, %65 : vector<8x32xf32>
    %67 = arith.truncf %66 : vector<8x32xf32> to vector<8x32xbf16>
    %c0_21 = arith.constant 0 : index
    %c0_22 = arith.constant 0 : index
    %c0_23 = arith.constant 0 : index
    %68 = vector.load %arg5[%c0_21, %c0_22, %c0_23] : memref<1x32x64xbf16, #tpu.memory_space<vmem>>, vector<1x32x64xbf16>
    %69 = vector.shape_cast %68 : vector<1x32x64xbf16> to vector<32x64xbf16>
    %cst_24 = arith.constant dense<0.000000e+00> : vector<8x64xf32>
    %70 = tpu.matmul %67, %69, %cst_24 {dimension_numbers = #tpu.dot_dimension_numbers<[1], [0], [0], [1], [0, 0, 1, 1], [], []>} : vector<8x32xbf16>, vector<32x64xbf16>, vector<8x64xf32> -> vector<8x64xf32>
    %71 = vector.extract_strided_slice %5 {offsets = [4, 0], sizes = [1, 64], strides = [1, 1]} : vector<8x96xf32> to vector<1x64xf32>
    %72 = vector.broadcast %71 : vector<1x64xf32> to vector<8x64xf32>
    %73 = arith.addf %70, %72 : vector<8x64xf32>
    %cst_25 = arith.constant 5.000000e-01 : f32
    %74 = vector.broadcast %cst_25 : f32 to vector<8x64xf32>
    %75 = arith.mulf %74, %73 : vector<8x64xf32>
    %cst_26 = arith.constant 4.471500e-02 : f32
    %76 = vector.broadcast %cst_26 : f32 to vector<8x64xf32>
    %77 = arith.mulf %76, %73 : vector<8x64xf32>
    %78 = arith.mulf %77, %73 : vector<8x64xf32>
    %79 = arith.mulf %78, %73 : vector<8x64xf32>
    %80 = arith.addf %73, %79 : vector<8x64xf32>
    %cst_27 = arith.constant 0.797884583 : f32
    %81 = vector.broadcast %cst_27 : f32 to vector<8x64xf32>
    %82 = arith.mulf %81, %80 : vector<8x64xf32>
    %83 = math.tanh %82 : vector<8x64xf32>
    %cst_28 = arith.constant 1.000000e+00 : f32
    %84 = vector.broadcast %cst_28 : f32 to vector<8x64xf32>
    %85 = arith.addf %84, %83 : vector<8x64xf32>
    %86 = arith.mulf %75, %85 : vector<8x64xf32>
    %87 = arith.truncf %86 : vector<8x64xf32> to vector<8x64xbf16>
    %c0_29 = arith.constant 0 : index
    %c0_30 = arith.constant 0 : index
    %c0_31 = arith.constant 0 : index
    %88 = vector.load %arg6[%c0_29, %c0_30, %c0_31] : memref<1x64x32xbf16, #tpu.memory_space<vmem>>, vector<1x64x32xbf16>
    %89 = vector.shape_cast %88 : vector<1x64x32xbf16> to vector<64x32xbf16>
    %cst_32 = arith.constant dense<0.000000e+00> : vector<8x32xf32>
    %90 = tpu.matmul %87, %89, %cst_32 {dimension_numbers = #tpu.dot_dimension_numbers<[1], [0], [0], [1], [0, 0, 1, 1], [], []>} : vector<8x64xbf16>, vector<64x32xbf16>, vector<8x32xf32> -> vector<8x32xf32>
    %91 = vector.extract_strided_slice %5 {offsets = [5, 0], sizes = [1, 32], strides = [1, 1]} : vector<8x96xf32> to vector<1x32xf32>
    %92 = vector.broadcast %91 : vector<1x32xf32> to vector<8x32xf32>
    %93 = arith.addf %90, %92 : vector<8x32xf32>
    %94 = arith.addf %93, %66 : vector<8x32xf32>
    %95 = vector.extract_strided_slice %5 {offsets = [6, 0], sizes = [1, 32], strides = [1, 1]} : vector<8x96xf32> to vector<1x32xf32>
    %96 = vector.extract_strided_slice %5 {offsets = [7, 0], sizes = [1, 32], strides = [1, 1]} : vector<8x96xf32> to vector<1x32xf32>
    %cst_33 = arith.constant dense<0.000000e+00> : vector<8xf32>
    %97 = vector.multi_reduction <add>, %94, %cst_33 [1] : vector<8x32xf32> to vector<8xf32>
    %98 = vector.shape_cast %97 : vector<8xf32> to vector<8x1xf32>
    %cst_34 = arith.constant 3.200000e+01 : f32
    %99 = vector.broadcast %cst_34 : f32 to vector<8x1xf32>
    %100 = arith.divf %98, %99 : vector<8x1xf32>
    %101 = vector.broadcast %100 : vector<8x1xf32> to vector<8x32xf32>
    %102 = arith.subf %94, %101 : vector<8x32xf32>
    %103 = arith.mulf %102, %102 : vector<8x32xf32>
    %cst_35 = arith.constant dense<0.000000e+00> : vector<8xf32>
    %104 = vector.multi_reduction <add>, %103, %cst_35 [1] : vector<8x32xf32> to vector<8xf32>
    %105 = vector.shape_cast %104 : vector<8xf32> to vector<8x1xf32>
    %cst_36 = arith.constant 3.200000e+01 : f32
    %106 = vector.broadcast %cst_36 : f32 to vector<8x1xf32>
    %107 = arith.divf %105, %106 : vector<8x1xf32>
    %cst_37 = arith.constant 9.99999996E-13 : f32
    %108 = vector.broadcast %cst_37 : f32 to vector<8x1xf32>
    %109 = arith.addf %107, %108 : vector<8x1xf32>
    %110 = math.rsqrt %109 : vector<8x1xf32>
    %111 = vector.broadcast %110 : vector<8x1xf32> to vector<8x32xf32>
    %112 = arith.mulf %102, %111 : vector<8x32xf32>
    %113 = vector.broadcast %95 : vector<1x32xf32> to vector<8x32xf32>
    %114 = arith.mulf %112, %113 : vector<8x32xf32>
    %115 = vector.broadcast %96 : vector<1x32xf32> to vector<8x32xf32>
    %116 = arith.addf %114, %115 : vector<8x32xf32>
    %c0_38 = arith.constant 0 : index
    %c0_39 = arith.constant 0 : index
    %117 = vector.load %arg9[%c0_38, %c0_39] : memref<8x32xf32, #tpu.memory_space<vmem>>, vector<8x32xf32>
    tpu.vector_store %arg9[%c0_38, %c0_39], %116 {strides = array<i32>} : memref<8x32xf32, #tpu.memory_space<vmem>>, vector<8x32xf32>,
    %c1_i32 = arith.constant 1 : i32
    %118 = arith.cmpi eq, %arg1, %c1_i32 : i32
    %119 = arith.extui %118 : i1 to i32
    %c0_i32_40 = arith.constant 0 : i32
    %120 = arith.cmpi ne, %119, %c0_i32_40 : i32
    scf.if %120 {
      %121 = vector.extract_strided_slice %116 {offsets = [0, 0], sizes = [1, 32], strides = [1, 1]} : vector<8x32xf32> to vector<1x32xf32>
      %c0_41 = arith.constant 0 : index
      %c0_42 = arith.constant 0 : index
      %c0_43 = arith.constant 0 : index
      %122 = vector.load %arg8[%c0_41, %c0_42, %c0_43] : memref<1x1x32xf32, #tpu.memory_space<vmem>>, vector<1x1x32xf32>
      %123 = vector.shape_cast %122 : vector<1x1x32xf32> to vector<1x32xf32>
      %124 = vector.shape_cast %121 : vector<1x32xf32> to vector<1x1x32xf32>
      tpu.vector_store %arg8[%c0_41, %c0_42, %c0_43], %124 {strides = array<i32>} : memref<1x1x32xf32, #tpu.memory_space<vmem>>, vector<1x1x32xf32>,
    } else {
    }
    return
  }
  func.func @transform_0(%arg0: i32, %arg1: i32) -> (i32, i32, i32) {
    %c0_i32 = arith.constant 0 : i32
    %c0_i32_0 = arith.constant 0 : i32
    %c0_i32_1 = arith.constant 0 : i32
    return %arg0, %c0_i32, %c0_i32_0 : i32, i32, i32
  }
  func.func @transform_1(%arg0: i32, %arg1: i32) -> (i32, i32, i32) {
    %c0_i32 = arith.constant 0 : i32
    %c0_i32_0 = arith.constant 0 : i32
    %c0_i32_1 = arith.constant 0 : i32
    return %arg1, %c0_i32, %c0_i32_0 : i32, i32, i32
  }
  func.func @transform_2(%arg0: i32, %arg1: i32) -> (i32, i32, i32) {
    %c0_i32 = arith.constant 0 : i32
    %c0_i32_0 = arith.constant 0 : i32
    %c0_i32_1 = arith.constant 0 : i32
    return %arg1, %c0_i32, %c0_i32_0 : i32, i32, i32
  }
  func.func @transform_3(%arg0: i32, %arg1: i32) -> (i32, i32, i32) {
    %c0_i32 = arith.constant 0 : i32
    %c0_i32_0 = arith.constant 0 : i32
    %c0_i32_1 = arith.constant 0 : i32
    return %arg1, %c0_i32, %c0_i32_0 : i32, i32, i32
  }
  func.func @transform_4(%arg0: i32, %arg1: i32) -> (i32, i32, i32) {
    %c0_i32 = arith.constant 0 : i32
    %c0_i32_0 = arith.constant 0 : i32
    %c0_i32_1 = arith.constant 0 : i32
    return %arg1, %c0_i32, %c0_i32_0 : i32, i32, i32
  }
  func.func @transform_5(%arg0: i32, %arg1: i32) -> (i32, i32, i32) {
    %c0_i32 = arith.constant 0 : i32
    %c0_i32_0 = arith.constant 0 : i32
    %c0_i32_1 = arith.constant 0 : i32
    return %arg1, %c0_i32, %c0_i32_0 : i32, i32, i32
  }
  func.func @transform_6(%arg0: i32, %arg1: i32) -> (i32, i32, i32) {
    %c0_i32 = arith.constant 0 : i32
    %c0_i32_0 = arith.constant 0 : i32
    %c0_i32_1 = arith.constant 0 : i32
    return %arg0, %c0_i32, %c0_i32_0 : i32, i32, i32
  }
}

</mosaic_0001>

<llo_original>
// kernel: tpu_custom_call.1
$region0: #{tpu_custom_call.1}
  #allocation0 [shape = 'u32[]', space=smem, size = 0x4, offset = 0x4, fixed_abs, tag = 'smem constant byte address 0x4 - core index']
  #allocation1 [shape = 'u32[144,128]{1,0:T(1,128)}', space=vmem, size = 0x12000, scoped, tag = 'internal scratch']
  #allocation2 [shape = 'f32[8,32]{1,0:T(8,128)}', space=vmem, size = 0x1000, scoped, tag = 'scratch operand']
  %s0 = inlined_call_operand.hbm [shape: f32[2,8,32], index: 0, kind: input, shape index: {}]
  %s1 = inlined_call_operand.hbm [shape: bf16[2,32,96], index: 1, kind: input, shape index: {}]
  %s2 = inlined_call_operand.hbm [shape: bf16[2,32,32], index: 2, kind: input, shape index: {}]
  %s3 = inlined_call_operand.hbm [shape: bf16[2,32,64], index: 3, kind: input, shape index: {}]
  %s4 = inlined_call_operand.hbm [shape: bf16[2,64,32], index: 4, kind: input, shape index: {}]
  %s5 = inlined_call_operand.hbm [shape: f32[2,8,96], index: 5, kind: input, shape index: {}]
  %s6 = inlined_call_operand.hbm [shape: f32[2,1,32], index: 6, kind: output, shape index: {}]
  %s7 = sld [smem:[#allocation0]]
  $region89: #{tpu_custom_call.1} parent=0
    _
  %s9 = ssub.s32 1, %s7
  %s10 = scalar_select 0, %s9, %s7
  $region1: #{tpu_custom_call.1} parent=0
    #allocation3 [shape = 'u8[8192]{0}', space=vmem, size = 0x2000, scoped, tag = 'input window, operand 0']
    #allocation4 [shape = 's32[2]{0}', space=sflag, size = 0x8, scoped, tag = 'scoped memory for tpu_custom_call.1']
    #allocation5 [shape = 's32[2]{0}', space=sflag, size = 0x8, scoped, tag = 'scoped memory for tpu_custom_call.1']
    #allocation6 [shape = 'u8[16384]{0}', space=vmem, size = 0x4000, scoped, tag = 'input window, operand 1']
    #allocation7 [shape = 's32[2]{0}', space=sflag, size = 0x8, scoped, tag = 'scoped memory for tpu_custom_call.1']
    #allocation8 [shape = 'u8[16384]{0}', space=vmem, size = 0x4000, scoped, tag = 'input window, operand 2']
    #allocation9 [shape = 'u8[16384]{0}', space=vmem, size = 0x4000, scoped, tag = 'input window, operand 3']
    #allocation10 [shape = 's32[2]{0}', space=sflag, size = 0x8, scoped, tag = 'scoped memory for tpu_custom_call.1']
    #allocation11 [shape = 'u8[32768]{0}', space=vmem, size = 0x8000, scoped, tag = 'input window, operand 4']
    #allocation12 [shape = 'u8[8192]{0}', space=vmem, size = 0x2000, scoped, tag = 'input window, operand 5']
    #allocation13 [shape = 's32[2]{0}', space=sflag, size = 0x8, scoped, tag = 'scoped memory for tpu_custom_call.1']
    #allocation14 [shape = 'u8[1024]{0}', space=vmem, size = 0x400, scoped, tag = 'output window, operand 0']
    %11 = vsyncpa [#allocation4], 0
    %s12 = scalar_lea.sflag [#allocation4], 1
    %13 = vsyncpa %s12, 0
    %14 = vsyncpa [#allocation7], 0
    %s15 = scalar_lea.sflag [#allocation7], 1
    %16 = vsyncpa %s15, 0
    %17 = vsyncpa [#allocation10], 0
    %s18 = scalar_lea.sflag [#allocation10], 1
    %19 = vsyncpa %s18, 0
    %20 = vsyncpa [#allocation13], 0
    %s21 = scalar_lea.sflag [#allocation13], 1
    %22 = vsyncpa %s21, 0
    %23 = vsyncpa [#allocation5], 0
    %s24 = scalar_lea.sflag [#allocation5], 1
    %25 = vsyncpa %s24, 0
    loop: start=0, step=1, limit=6
    $region2: #{tpu_custom_call.1} parent=1 // loop_pre_header
      _
    $region3: #{tpu_custom_call.1} parent=1 // loop_header
      %s27 = sphi 0, %s31
      %p28 = scmp.ge.s32.totalorder %s27, 6
      %s34 = sphi 0, %s46
      %s35 = sphi 0, %s42
      %s36 = sphi 0, %s34
      %s37 = sphi 0, %s35
      %s38 = sphi 0, %s36
      %s39 = sphi 0, %s37
      %s49 = sphi 0, %s51
      %s52 = sphi 0, %s49
      %s53 = sphi 0, %s52
      %s69 = sphi 0, %s53
      %s75 = sphi 0, %s77
      %s78 = sphi 0, %s75
      %s79 = sphi 0, %s78
      %s95 = sphi 0, %s79
      %s101 = sphi 0, %s103
      %s104 = sphi 0, %s101
      %s105 = sphi 0, %s104
      %s121 = sphi 0, %s105
      %s127 = sphi 0, %s129
      %s130 = sphi 0, %s127
      %s131 = sphi 0, %s130
      %s147 = sphi 0, %s131
      %s153 = sphi 0, %s155
      %s156 = sphi 0, %s153
      %s157 = sphi 0, %s156
      %s173 = sphi 0, %s157
      %s179 = sphi 0, %s181
      %s182 = sphi 0, %s179
      %s183 = sphi 0, %s182
      %s199 = sphi 0, %s183
      %s205 = sphi 0, %s207
      %s208 = sphi 0, %s205
      %s209 = sphi 0, %s208
      %s225 = sphi 0, %s209
    $region4: #{tpu_custom_call.1} parent=1 // loop_header_branch
      %30 = sbr.rel (%p28) target = $region8
    $region5: #{tpu_custom_call.1} parent=1 // loop_body
      %s32 = ssub.s32 %s27, 1
      %s33 = ssub.s32 %s27, 2
      %s40 = sadd.s32 1, %s35
      %p41 = scmp.ge.s32.totalorder %s40, 2
      %s42 = scalar_select %p41, 0, %s40
      %s43 = sadd.s32 1, %s34
      %s44 = scalar_select %p41, %s43, %s34
      %p45 = scmp.ge.s32.totalorder %s44, 2
      %s46 = scalar_select %p45, 0, %s44
      %s47 = ssub.s32 %s34, %s46
      %p48 = scmp.eq.s32.totalorder %s47, 0
      %s50 = sadd.s32 %s49, 1
      %s51 = scalar_select %p48, %s49, %s50
      %p54 = pneg %p48
      %p55 = scmp.eq.s32.totalorder %s27, 3
      %p56 = por %p54, %p55
      %p57 = scmp.ne.s32.totalorder %s49, %s52
      %p58 = scmp.eq.s32.totalorder %s27, 0
      %p59 = por %p57, %p58
      %p60 = scmp.ne.s32.totalorder %s49, %s52
      %p61 = scmp.eq.s32.totalorder %s32, 3
      %p62 = por %p60, %p61
      %p63 = scmp.ne.s32.totalorder %s52, %s53
      %p64 = scmp.eq.s32.totalorder %s32, 0
      %p65 = por %p63, %p64
      %p66 = scmp.ne.s32.totalorder %s52, %s53
      %p67 = scmp.eq.s32.totalorder %s33, 3
      %p68 = por %p66, %p67
      %p70 = scmp.ne.s32.totalorder %s53, %s69
      %p71 = scmp.eq.s32.totalorder %s33, 0
      %p72 = por %p70, %p71
      %s73 = ssub.s32 %s35, %s42
      %p74 = scmp.eq.s32.totalorder %s73, 0
      %s76 = sadd.s32 %s75, 1
      %s77 = scalar_select %p74, %s75, %s76
      %p80 = pneg %p74
      %p81 = scmp.eq.s32.totalorder %s27, 3
      %p82 = por %p80, %p81
      %p83 = scmp.ne.s32.totalorder %s75, %s78
      %p84 = scmp.eq.s32.totalorder %s27, 0
      %p85 = por %p83, %p84
      %p86 = scmp.ne.s32.totalorder %s75, %s78
      %p87 = scmp.eq.s32.totalorder %s32, 3
      %p88 = por %p86, %p87
      %p89 = scmp.ne.s32.totalorder %s78, %s79
      %p90 = scmp.eq.s32.totalorder %s32, 0
      %p91 = por %p89, %p90
      %p92 = scmp.ne.s32.totalorder %s78, %s79
      %p93 = scmp.eq.s32.totalorder %s33, 3
      %p94 = por %p92, %p93
      %p96 = scmp.ne.s32.totalorder %s79, %s95
      %p97 = scmp.eq.s32.totalorder %s33, 0
      %p98 = por %p96, %p97
      %s99 = ssub.s32 %s35, %s42
      %p100 = scmp.eq.s32.totalorder %s99, 0
      %s102 = sadd.s32 %s101, 1
      %s103 = scalar_select %p100, %s101, %s102
      %p106 = pneg %p100
      %p107 = scmp.eq.s32.totalorder %s27, 3
      %p108 = por %p106, %p107
      %p109 = scmp.ne.s32.totalorder %s101, %s104
      %p110 = scmp.eq.s32.totalorder %s27, 0
      %p111 = por %p109, %p110
      %p112 = scmp.ne.s32.totalorder %s101, %s104
      %p113 = scmp.eq.s32.totalorder %s32, 3
      %p114 = por %p112, %p113
      %p115 = scmp.ne.s32.totalorder %s104, %s105
      %p116 = scmp.eq.s32.totalorder %s32, 0
      %p117 = por %p115, %p116
      %p118 = scmp.ne.s32.totalorder %s104, %s105
      %p119 = scmp.eq.s32.totalorder %s33, 3
      %p120 = por %p118, %p119
      %p122 = scmp.ne.s32.totalorder %s105, %s121
      %p123 = scmp.eq.s32.totalorder %s33, 0
      %p124 = por %p122, %p123
      %s125 = ssub.s32 %s35, %s42
      %p126 = scmp.eq.s32.totalorder %s125, 0
      %s128 = sadd.s32 %s127, 1
      %s129 = scalar_select %p126, %s127, %s128
      %p132 = pneg %p126
      %p133 = scmp.eq.s32.totalorder %s27, 3
      %p134 = por %p132, %p133
      %p135 = scmp.ne.s32.totalorder %s127, %s130
      %p136 = scmp.eq.s32.totalorder %s27, 0
      %p137 = por %p135, %p136
      %p138 = scmp.ne.s32.totalorder %s127, %s130
      %p139 = scmp.eq.s32.totalorder %s32, 3
      %p140 = por %p138, %p139
      %p141 = scmp.ne.s32.totalorder %s130, %s131
      %p142 = scmp.eq.s32.totalorder %s32, 0
      %p143 = por %p141, %p142
      %p144 = scmp.ne.s32.totalorder %s130, %s131
      %p145 = scmp.eq.s32.totalorder %s33, 3
      %p146 = por %p144, %p145
      %p148 = scmp.ne.s32.totalorder %s131, %s147
      %p149 = scmp.eq.s32.totalorder %s33, 0
      %p150 = por %p148, %p149
      %s151 = ssub.s32 %s35, %s42
      %p152 = scmp.eq.s32.totalorder %s151, 0
      %s154 = sadd.s32 %s153, 1
      %s155 = scalar_select %p152, %s153, %s154
      %p158 = pneg %p152
      %p159 = scmp.eq.s32.totalorder %s27, 3
      %p160 = por %p158, %p159
      %p161 = scmp.ne.s32.totalorder %s153, %s156
      %p162 = scmp.eq.s32.totalorder %s27, 0
      %p163 = por %p161, %p162
      %p164 = scmp.ne.s32.totalorder %s153, %s156
      %p165 = scmp.eq.s32.totalorder %s32, 3
      %p166 = por %p164, %p165
      %p167 = scmp.ne.s32.totalorder %s156, %s157
      %p168 = scmp.eq.s32.totalorder %s32, 0
      %p169 = por %p167, %p168
      %p170 = scmp.ne.s32.totalorder %s156, %s157
      %p171 = scmp.eq.s32.totalorder %s33, 3
      %p172 = por %p170, %p171
      %p174 = scmp.ne.s32.totalorder %s157, %s173
      %p175 = scmp.eq.s32.totalorder %s33, 0
      %p176 = por %p174, %p175
      %s177 = ssub.s32 %s35, %s42
      %p178 = scmp.eq.s32.totalorder %s177, 0
      %s180 = sadd.s32 %s179, 1
      %s181 = scalar_select %p178, %s179, %s180
      %p184 = pneg %p178
      %p185 = scmp.eq.s32.totalorder %s27, 3
      %p186 = por %p184, %p185
      %p187 = scmp.ne.s32.totalorder %s179, %s182
      %p188 = scmp.eq.s32.totalorder %s27, 0
      %p189 = por %p187, %p188
      %p190 = scmp.ne.s32.totalorder %s179, %s182
      %p191 = scmp.eq.s32.totalorder %s32, 3
      %p192 = por %p190, %p191
      %p193 = scmp.ne.s32.totalorder %s182, %s183
      %p194 = scmp.eq.s32.totalorder %s32, 0
      %p195 = por %p193, %p194
      %p196 = scmp.ne.s32.totalorder %s182, %s183
      %p197 = scmp.eq.s32.totalorder %s33, 3
      %p198 = por %p196, %p197
      %p200 = scmp.ne.s32.totalorder %s183, %s199
      %p201 = scmp.eq.s32.totalorder %s33, 0
      %p202 = por %p200, %p201
      %s203 = ssub.s32 %s34, %s46
      %p204 = scmp.eq.s32.totalorder %s203, 0
      %s206 = sadd.s32 %s205, 1
      %s207 = scalar_select %p204, %s205, %s206
      %p210 = pneg %p204
      %p211 = scmp.eq.s32.totalorder %s27, 3
      %p212 = por %p210, %p211
      %p213 = scmp.ne.s32.totalorder %s205, %s208
      %p214 = scmp.eq.s32.totalorder %s27, 0
      %p215 = por %p213, %p214
      %p216 = scmp.ne.s32.totalorder %s205, %s208
      %p217 = scmp.eq.s32.totalorder %s32, 3
      %p218 = por %p216, %p217
      %p219 = scmp.ne.s32.totalorder %s208, %s209
      %p220 = scmp.eq.s32.totalorder %s32, 0
      %p221 = por %p219, %p220
      %p222 = scmp.ne.s32.totalorder %s208, %s209
      %p223 = scmp.eq.s32.totalorder %s33, 3
      %p224 = por %p222, %p223
      %p226 = scmp.ne.s32.totalorder %s209, %s225
      %p227 = scmp.eq.s32.totalorder %s33, 0
      %p228 = por %p226, %p227
      %p229 = scmp.le.s32.totalorder 1, %s27
      %p230 = scmp.lt.s32.totalorder %s27, 5
      %p231 = pnand %p229, %p230
      %p232 = pneg %p231
      // Predicated region
      $region9: #{tpu_custom_call.1} parent=5 // pred_check
        _
      $region10: #{tpu_custom_call.1} parent=5 // pred_check_branch
        %234 = sbr.rel (%p231) target = $region12
      $region11: #{tpu_custom_call.1} parent=5 // pred_region
        %s235 = ssub.s32 %s27, 1
      $region12: #{tpu_custom_call.1} parent=5 // pred_fallthru
        _
      %p236 = scmp.lt.s32.totalorder %s27, 4
      // Predicated region
      $region13: #{tpu_custom_call.1} parent=5 // pred_check
        %p237 = pneg %p236
      $region14: #{tpu_custom_call.1} parent=5 // pred_check_branch
        %239 = sbr.rel (%p237) target = $region16
      $region15: #{tpu_custom_call.1} parent=5 // pred_region
        // Predicated region
        $region17: #{tpu_custom_call.1} parent=15 // pred_check
          %p240 = pneg %p59
        $region18: #{tpu_custom_call.1} parent=15 // pred_check_branch
          %242 = sbr.rel (%p240) target = $region20
        $region19: #{tpu_custom_call.1} parent=15 // pred_region
          %s243 = sand.u32 %s49, 1
          %s244 = scalar_lea.sflag [#allocation4], %s243
          %s245 = sand.u32 %s49, 1
          %s246 = smul.addr %s245, 8
          %s247 = scalar_lea.vmem [#allocation3], %s246
          %s249 = ssub.s32 128, 128
          %250 = vsyncadd %s244, %s249
          %s251 = smul.addr %s34, 128
          %s252 = scalar_lea.hbm %s0, %s251
          %s254 = sshll.u32 %s247, 4
          %s255 = int_to_ptr.vmem [resolvable:$true] %s254
          %257 = dma.hbm_to_vmem [thread:$0]  %s252, 128, %s255, %s244
        $region20: #{tpu_custom_call.1} parent=15 // pred_fallthru
          _
        // Predicated region
        $region21: #{tpu_custom_call.1} parent=15 // pred_check
          %p258 = pneg %p85
        $region22: #{tpu_custom_call.1} parent=15 // pred_check_branch
          %260 = sbr.rel (%p258) target = $region24
        $region23: #{tpu_custom_call.1} parent=15 // pred_region
          %s261 = sand.u32 %s27, 1
          %s262 = scalar_lea.sflag [#allocation7], %s261
          %s263 = sand.u32 %s75, 1
          %s264 = smul.addr %s263, 16
          %s265 = scalar_lea.vmem [#allocation6], %s264
          %s267 = ssub.s32 256, 256
          %268 = vsyncadd %s262, %s267
          %s269 = smul.addr %s35, 4
          %s270 = smul.addr %s269, 64
          %s271 = scalar_lea.hbm %s1, %s270
          %s272 = sshll.u32 %s265, 4
          %s273 = int_to_ptr.vmem [resolvable:$true] %s272
          %278 = dma.hbm_to_vmem [thread:$0]  %s271, 256, %s273, %s262, 64, 64, 4
        $region24: #{tpu_custom_call.1} parent=15 // pred_fallthru
          _
        // Predicated region
        $region25: #{tpu_custom_call.1} parent=15 // pred_check
          %p279 = pneg %p111
        $region26: #{tpu_custom_call.1} parent=15 // pred_check_branch
          %281 = sbr.rel (%p279) target = $region28
        $region27: #{tpu_custom_call.1} parent=15 // pred_region
          %s282 = sand.u32 %s27, 1
          %s283 = scalar_lea.sflag [#allocation7], %s282
          %s284 = sand.u32 %s101, 1
          %s285 = smul.addr %s284, 16
          %s286 = scalar_lea.vmem [#allocation8], %s285
          %s288 = ssub.s32 256, 256
          %289 = vsyncadd %s283, %s288
          %s290 = smul.addr %s35, 4
          %s291 = smul.addr %s290, 64
          %s292 = scalar_lea.hbm %s2, %s291
          %s293 = sshll.u32 %s286, 4
          %s294 = int_to_ptr.vmem [resolvable:$true] %s293
          %299 = dma.hbm_to_vmem [thread:$0]  %s292, 256, %s294, %s283, 64, 64, 4
        $region28: #{tpu_custom_call.1} parent=15 // pred_fallthru
          _
        // Predicated region
        $region29: #{tpu_custom_call.1} parent=15 // pred_check
          %p300 = pneg %p137
        $region30: #{tpu_custom_call.1} parent=15 // pred_check_branch
          %302 = sbr.rel (%p300) target = $region32
        $region31: #{tpu_custom_call.1} parent=15 // pred_region
          %s303 = sand.u32 %s27, 1
          %s304 = scalar_lea.sflag [#allocation10], %s303
          %s305 = sand.u32 %s127, 1
          %s306 = smul.addr %s305, 16
          %s307 = scalar_lea.vmem [#allocation9], %s306
          %s309 = ssub.s32 256, 256
          %310 = vsyncadd %s304, %s309
          %s311 = smul.addr %s35, 4
          %s312 = smul.addr %s311, 64
          %s313 = scalar_lea.hbm %s3, %s312
          %s314 = sshll.u32 %s307, 4
          %s315 = int_to_ptr.vmem [resolvable:$true] %s314
          %320 = dma.hbm_to_vmem [thread:$0]  %s313, 256, %s315, %s304, 64, 64, 4
        $region32: #{tpu_custom_call.1} parent=15 // pred_fallthru
          _
        // Predicated region
        $region33: #{tpu_custom_call.1} parent=15 // pred_check
          %p321 = pneg %p163
        $region34: #{tpu_custom_call.1} parent=15 // pred_check_branch
          %323 = sbr.rel (%p321) target = $region36
        $region35: #{tpu_custom_call.1} parent=15 // pred_region
          %s324 = sand.u32 %s27, 1
          %s325 = scalar_lea.sflag [#allocation10], %s324
          %s326 = sand.u32 %s153, 1
          %s327 = smul.addr %s326, 32
          %s328 = scalar_lea.vmem [#allocation11], %s327
          %s330 = ssub.s32 512, 512
          %331 = vsyncadd %s325, %s330
          %s332 = smul.addr %s35, 8
          %s333 = smul.addr %s332, 64
          %s334 = scalar_lea.hbm %s4, %s333
          %s335 = sshll.u32 %s328, 4
          %s336 = int_to_ptr.vmem [resolvable:$true] %s335
          %341 = dma.hbm_to_vmem [thread:$0]  %s334, 512, %s336, %s325, 64, 64, 4
        $region36: #{tpu_custom_call.1} parent=15 // pred_fallthru
          _
        // Predicated region
        $region37: #{tpu_custom_call.1} parent=15 // pred_check
          %p342 = pneg %p189
        $region38: #{tpu_custom_call.1} parent=15 // pred_check_branch
          %344 = sbr.rel (%p342) target = $region40
        $region39: #{tpu_custom_call.1} parent=15 // pred_region
          %s345 = sand.u32 %s179, 1
          %s346 = scalar_lea.sflag [#allocation13], %s345
          %s347 = sand.u32 %s179, 1
          %s348 = smul.addr %s347, 8
          %s349 = scalar_lea.vmem [#allocation12], %s348
          %s351 = ssub.s32 128, 128
          %352 = vsyncadd %s346, %s351
          %s353 = smul.addr %s35, 128
          %s354 = scalar_lea.hbm %s5, %s353
          %s356 = sshll.u32 %s349, 4
          %s357 = int_to_ptr.vmem [resolvable:$true] %s356
          %359 = dma.hbm_to_vmem [thread:$0]  %s354, 128, %s357, %s346
        $region40: #{tpu_custom_call.1} parent=15 // pred_fallthru
          _
      $region16: #{tpu_custom_call.1} parent=5 // pred_fallthru
        _
      %p360 = scmp.le.s32.totalorder 1, %s27
      %p361 = scmp.lt.s32.totalorder %s27, 5
      %p362 = pnand %p360, %p361
      %p363 = pneg %p362
      // Predicated region
      $region41: #{tpu_custom_call.1} parent=5 // pred_check
        _
      $region42: #{tpu_custom_call.1} parent=5 // pred_check_branch
        %365 = sbr.rel (%p362) target = $region44
      $region43: #{tpu_custom_call.1} parent=5 // pred_region
        %s366 = ssub.s32 %s27, 1
        %s367 = sand.u32 %s52, 1
        %s368 = scalar_lea.sflag [#allocation4], %s367
        %s369 = sand.u32 %s52, 1
        %s370 = smul.addr %s369, 8
        %s371 = scalar_lea.vmem [#allocation3], %s370
        // Predicated region
        $region45: #{tpu_custom_call.1} parent=43 // pred_check
          %p372 = pneg %p65
        $region46: #{tpu_custom_call.1} parent=43 // pred_check_branch
          %374 = sbr.rel (%p372) target = $region48
        $region47: #{tpu_custom_call.1} parent=43 // pred_region
          %375 = dma.done %s368, 128
        $region48: #{tpu_custom_call.1} parent=43 // pred_fallthru
          _
        %s376 = sand.u32 %s32, 1
        %s377 = scalar_lea.sflag [#allocation7], %s376
        %s378 = sand.u32 %s78, 1
        %s379 = smul.addr %s378, 16
        %s380 = scalar_lea.vmem [#allocation6], %s379
        // Predicated region
        $region49: #{tpu_custom_call.1} parent=43 // pred_check
          %p381 = pneg %p91
        $region50: #{tpu_custom_call.1} parent=43 // pred_check_branch
          %383 = sbr.rel (%p381) target = $region52
        $region51: #{tpu_custom_call.1} parent=43 // pred_region
          %384 = dma.done %s377, 256
        $region52: #{tpu_custom_call.1} parent=43 // pred_fallthru
          _
        %s385 = sand.u32 %s32, 1
        %s386 = scalar_lea.sflag [#allocation7], %s385
        %s387 = sand.u32 %s104, 1
        %s388 = smul.addr %s387, 16
        %s389 = scalar_lea.vmem [#allocation8], %s388
        // Predicated region
        $region53: #{tpu_custom_call.1} parent=43 // pred_check
          %p390 = pneg %p117
        $region54: #{tpu_custom_call.1} parent=43 // pred_check_branch
          %392 = sbr.rel (%p390) target = $region56
        $region55: #{tpu_custom_call.1} parent=43 // pred_region
          %393 = dma.done %s386, 256
        $region56: #{tpu_custom_call.1} parent=43 // pred_fallthru
          _
        %s394 = sand.u32 %s32, 1
        %s395 = scalar_lea.sflag [#allocation10], %s394
        %s396 = sand.u32 %s130, 1
        %s397 = smul.addr %s396, 16
        %s398 = scalar_lea.vmem [#allocation9], %s397
        // Predicated region
        $region57: #{tpu_custom_call.1} parent=43 // pred_check
          %p399 = pneg %p143
        $region58: #{tpu_custom_call.1} parent=43 // pred_check_branch
          %401 = sbr.rel (%p399) target = $region60
        $region59: #{tpu_custom_call.1} parent=43 // pred_region
          %402 = dma.done %s395, 256
        $region60: #{tpu_custom_call.1} parent=43 // pred_fallthru
          _
        %s403 = sand.u32 %s32, 1
        %s404 = scalar_lea.sflag [#allocation10], %s403
        %s405 = sand.u32 %s156, 1
        %s406 = smul.addr %s405, 32
        %s407 = scalar_lea.vmem [#allocation11], %s406
        // Predicated region
        $region61: #{tpu_custom_call.1} parent=43 // pred_check
          %p408 = pneg %p169
        $region62: #{tpu_custom_call.1} parent=43 // pred_check_branch
          %410 = sbr.rel (%p408) target = $region64
        $region63: #{tpu_custom_call.1} parent=43 // pred_region
          %411 = dma.done %s404, 512
        $region64: #{tpu_custom_call.1} parent=43 // pred_fallthru
          _
        %s412 = sand.u32 %s182, 1
        %s413 = scalar_lea.sflag [#allocation13], %s412
        %s414 = sand.u32 %s182, 1
        %s415 = smul.addr %s414, 8
        %s416 = scalar_lea.vmem [#allocation12], %s415
        // Predicated region
        $region65: #{tpu_custom_call.1} parent=43 // pred_check
          %p417 = pneg %p195
        $region66: #{tpu_custom_call.1} parent=43 // pred_check_branch
          %419 = sbr.rel (%p417) target = $region68
        $region67: #{tpu_custom_call.1} parent=43 // pred_region
          %420 = dma.done %s413, 128
        $region68: #{tpu_custom_call.1} parent=43 // pred_fallthru
          _
        %s421 = sand.u32 %s52, 1
        %s422 = scalar_lea.sflag [#allocation4], %s421
        %s423 = sand.u32 %s52, 1
        %s424 = smul.addr %s423, 8
        %s425 = scalar_lea.vmem [#allocation3], %s424
        %p426 = pneg %p65
        %p427 = pneg %p62
        %s428 = sand.u32 %s32, 1
        %s429 = scalar_lea.sflag [#allocation7], %s428
        %s430 = sand.u32 %s78, 1
        %s431 = smul.addr %s430, 16
        %s432 = scalar_lea.vmem [#allocation6], %s431
        %p433 = pneg %p91
        %p434 = pneg %p88
        %s435 = sand.u32 %s32, 1
        %s436 = scalar_lea.sflag [#allocation7], %s435
        %s437 = sand.u32 %s104, 1
        %s438 = smul.addr %s437, 16
        %s439 = scalar_lea.vmem [#allocation8], %s438
        %p440 = pneg %p117
        %p441 = pneg %p114
        %s442 = sand.u32 %s32, 1
        %s443 = scalar_lea.sflag [#allocation10], %s442
        %s444 = sand.u32 %s130, 1
        %s445 = smul.addr %s444, 16
        %s446 = scalar_lea.vmem [#allocation9], %s445
        %p447 = pneg %p143
        %p448 = pneg %p140
        %s449 = sand.u32 %s32, 1
        %s450 = scalar_lea.sflag [#allocation10], %s449
        %s451 = sand.u32 %s156, 1
        %s452 = smul.addr %s451, 32
        %s453 = scalar_lea.vmem [#allocation11], %s452
        %p454 = pneg %p169
        %p455 = pneg %p166
        %s456 = sand.u32 %s182, 1
        %s457 = scalar_lea.sflag [#allocation13], %s456
        %s458 = sand.u32 %s182, 1
        %s459 = smul.addr %s458, 8
        %s460 = scalar_lea.vmem [#allocation12], %s459
        %p461 = pneg %p195
        %p462 = pneg %p192
        %p463 = pneg %p221
        %p464 = pneg %p218
        %s465 = sand.u32 %s208, 1
        %s466 = scalar_lea.sflag [#allocation5], %s465
        %s467 = sand.u32 %s208, 1
        %s468 = scalar_lea.vmem [#allocation14], %s467
        %p470 = scmp.eq.s32.totalorder %s37, 0
        // Predicated region
        $region69: #{tpu_custom_call.1} parent=43 // pred_check
          %p471 = pneg %p470
        $region70: #{tpu_custom_call.1} parent=43 // pred_check_branch
          %473 = sbr.rel (%p471) target = $region72
        $region71: #{tpu_custom_call.1} parent=43 // pred_region
          %v474 = vld [vmem:[%s371] sm:$0xff]
          %vm475 = vcmask 261120
          %476 = vst.msk [vmem:[#allocation2] sm:$0xff] %vm475, %v474
        $region72: #{tpu_custom_call.1} parent=43 // pred_fallthru
          _
        %v477 = vld [vmem:[#allocation2] sm:$0xff]
        %v478 = vld [vmem:[%s416] sm:$0xff]
        %v479 = vpack.c.bf16 %v477, %v477
        %v480 = vld [vmem:[%s380] sm:$0xf]
        %v481 = vld [vmem:[%s380 + $0x4] sm:$0xf]
        %v482 = vld [vmem:[%s380 + $0x8] sm:$0xf]
        %v483 = vld [vmem:[%s380 + $0xc] sm:$0xf]
        %v484 = vlaneseq
        %v485 = vshrl.u32 %v484, 7
        %v486 = vsub.s32 0, %v485
        %v487 = vrot.slane %v478, %v486
        %v492 = vunpack.c.l.b16 %v480
        %v493 = vunpack.c.l.b16 %v481
        %v494 = vunpack.c.l.b16 %v482
        %v495 = vunpack.c.l.b16 %v483
        %v496 = vpack.c.b16 %v493, %v492
        %v497 = vpack.c.b16 %v495, %v494
        %vm500 = vcmask 261120
        %v502 = vsel %vm500, %v479, 0
        %504 = vmatprep.subr.bf16.mxu0 0
        %505 = vmatpush1.bf16.msra.mxu0 %v496
        %506 = vmatprep.subr.bf16.mxu0 0
        %507 = vmatpush1.bf16.msra.mxu0 %v497
        %508 = vmatprep.subr.bf16.mxu0 0
        %509 = vmatpush1.bf16.msra.mxu0 0
        %510 = vmatprep.subr.bf16.mxu0 0
        %511 = vmatpush1.bf16.msra.mxu0 0
        %512 = vmatprep.subr.bf16.mxu0 0
        %513 = vmatpush1.bf16.msra.mxu0 0
        %514 = vmatprep.subr.bf16.mxu0 0
        %515 = vmatpush1.bf16.msra.mxu0 0
        %516 = vmatprep.subr.bf16.mxu0 0
        %517 = vmatpush1.bf16.msra.mxu0 0
        %518 = vmatprep.subr.bf16.mxu0 0
        %519 = vmatpush1.bf16.msra.mxu0 0
        %520 = vmatprep.subr.bf16.mxu0 0
        %521 = vmatpush1.bf16.msra.mxu0 0
        %522 = vmatprep.subr.bf16.mxu0 0
        %523 = vmatpush1.bf16.msra.mxu0 0
        %524 = vmatprep.subr.bf16.mxu0 0
        %525 = vmatpush1.bf16.msra.mxu0 0
        %526 = vmatprep.subr.bf16.mxu0 0
        %527 = vmatpush1.bf16.msra.mxu0 0
        %528 = vmatprep.subr.bf16.mxu0 0
        %529 = vmatpush1.bf16.msra.mxu0 0
        %530 = vmatprep.subr.bf16.mxu0 0
        %531 = vmatpush1.bf16.msra.mxu0 0
        %532 = vmatprep.subr.bf16.mxu0 0
        %533 = vmatpush1.bf16.msra.mxu0 0
        %534 = vmatprep.subr.bf16.mxu0 0
        %535 = vmatpush1.bf16.msra.mxu0 0
        %536 = vmatprep.mubr.bf16.mxu0 0
        %537 = vmatmul.mubr.bf16.gmra.mrb[0].mxu0 %v502
        %v538 = vpop.f32.mrb[0].mxu0
        %v539 = vadd.f32 %v487, %v538
        %v540 = vpop.f32.mrb[0].mxu0
        %v541 = vpop.f32.mrb[0].mxu0
        %v542 = vpop.f32.mrb[0].mxu0
        %543 = vdwg.mxu0
        %545 = vrot.lane.b32.xlu0 %v539, 120
        %v546 = vpop.permute.xlu0 %545
        %548 = vrot.lane.b32.xlu0 %v539, 112
        %v549 = vpop.permute.xlu0 %548
        %551 = vrot.lane.b32.xlu0 %v539, 104
        %v552 = vpop.permute.xlu0 %551
        %v554 = vcombine.low %v539, %v549
        %v555 = vcombine.high %v539, %v549
        %v557 = vunpack.c.l.s4 1983009808
        %v558 = vunpack.c.0.s8 %v557
        %v559 = vlaneseq
        %v560 = vshrl.u32 %v559, 7
        %v561 = vsub.s32 %v558, %v560
        %v562 = vrot.slane %v554, %v561
        %v564 = vunpack.c.l.s4 1983009808
        %v565 = vunpack.c.0.s8 %v564
        %v566 = vlaneseq
        %v567 = vshrl.u32 %v566, 7
        %v568 = vsub.s32 %v565, %v567
        %v569 = vrot.slane %v555, %v568
        %v570 = vcombine.low %v546, %v552
        %v571 = vcombine.high %v546, %v552
        %v573 = vunpack.c.l.s4 1983009808
        %v574 = vunpack.c.0.s8 %v573
        %v575 = vlaneseq
        %v576 = vshrl.u32 %v575, 7
        %v577 = vsub.s32 %v574, %v576
        %v578 = vrot.slane %v570, %v577
        %v580 = vunpack.c.l.s4 1983009808
        %v581 = vunpack.c.0.s8 %v580
        %v582 = vlaneseq
        %v583 = vshrl.u32 %v582, 7
        %v584 = vsub.s32 %v581, %v583
        %v585 = vrot.slane %v571, %v584
        %v586 = vcombine.low %v562, %v578
        %v587 = vcombine.high %v562, %v578
        %v589 = vunpack.c.l.s4 1934713408
        %v590 = vunpack.c.0.s8 %v589
        %v591 = vlaneseq
        %v592 = vshrl.u32 %v591, 7
        %v593 = vsub.s32 %v590, %v592
        %v594 = vrot.slane %v586, %v593
        %v596 = vunpack.c.l.s4 1934713408
        %v597 = vunpack.c.0.s8 %v596
        %v598 = vlaneseq
        %v599 = vshrl.u32 %v598, 7
        %v600 = vsub.s32 %v597, %v599
        %v601 = vrot.slane %v587, %v600
        %v602 = vcombine.low %v569, %v585
        %v603 = vcombine.high %v569, %v585
        %v605 = vunpack.c.l.s4 1934713408
        %v606 = vunpack.c.0.s8 %v605
        %v607 = vlaneseq
        %v608 = vshrl.u32 %v607, 7
        %v609 = vsub.s32 %v606, %v608
        %v610 = vrot.slane %v602, %v609
        %v612 = vunpack.c.l.s4 1934713408
        %v613 = vunpack.c.0.s8 %v612
        %v614 = vlaneseq
        %v615 = vshrl.u32 %v614, 7
        %v616 = vsub.s32 %v613, %v615
        %v617 = vrot.slane %v603, %v616
        %v618 = vcombine.high %v594, 0.0
        %v619 = vcombine.high %v601, 0.0
        %v620 = vcombine.high %v610, 0.0
        %v621 = vcombine.high %v617, 0.0
        %v622 = vpack.c.bf16 %v594, %v594
        %v623 = vpack.c.bf16 %v618, %v618
        %v624 = vpack.c.bf16 %v601, %v601
        %v625 = vpack.c.bf16 %v619, %v619
        %v626 = vpack.c.bf16 %v610, %v610
        %v627 = vpack.c.bf16 %v620, %v620
        %v628 = vpack.c.bf16 %v617, %v617
        %v629 = vpack.c.bf16 %v621, %v621
        %630 = vrot.lane.b32.xlu0 %v539, 96
        %v631 = vpop.permute.xlu0 %630
        %632 = vrot.lane.b32.xlu0 %v546, 96
        %v633 = vpop.permute.xlu0 %632
        %634 = vrot.lane.b32.xlu0 %v549, 96
        %v635 = vpop.permute.xlu0 %634
        %636 = vrot.lane.b32.xlu0 %v552, 96
        %v637 = vpop.permute.xlu0 %636
        %v642 = vcombine.low %v631, %v635
        %v643 = vcombine.high %v631, %v635
        %v645 = vunpack.c.l.s4 1983009808
        %v646 = vunpack.c.0.s8 %v645
        %v647 = vlaneseq
        %v648 = vshrl.u32 %v647, 7
        %v649 = vsub.s32 %v646, %v648
        %v650 = vrot.slane %v642, %v649
        %v652 = vunpack.c.l.s4 1983009808
        %v653 = vunpack.c.0.s8 %v652
        %v654 = vlaneseq
        %v655 = vshrl.u32 %v654, 7
        %v656 = vsub.s32 %v653, %v655
        %v657 = vrot.slane %v643, %v656
        %v658 = vcombine.low %v633, %v637
        %v659 = vcombine.high %v633, %v637
        %v661 = vunpack.c.l.s4 1983009808
        %v662 = vunpack.c.0.s8 %v661
        %v663 = vlaneseq
        %v664 = vshrl.u32 %v663, 7
        %v665 = vsub.s32 %v662, %v664
        %v666 = vrot.slane %v658, %v665
        %v668 = vunpack.c.l.s4 1983009808
        %v669 = vunpack.c.0.s8 %v668
        %v670 = vlaneseq
        %v671 = vshrl.u32 %v670, 7
        %v672 = vsub.s32 %v669, %v671
        %v673 = vrot.slane %v659, %v672
        %v674 = vcombine.low %v650, %v666
        %v675 = vcombine.high %v650, %v666
        %v677 = vunpack.c.l.s4 1934713408
        %v678 = vunpack.c.0.s8 %v677
        %v679 = vlaneseq
        %v680 = vshrl.u32 %v679, 7
        %v681 = vsub.s32 %v678, %v680
        %v682 = vrot.slane %v674, %v681
        %v684 = vunpack.c.l.s4 1934713408
        %v685 = vunpack.c.0.s8 %v684
        %v686 = vlaneseq
        %v687 = vshrl.u32 %v686, 7
        %v688 = vsub.s32 %v685, %v687
        %v689 = vrot.slane %v675, %v688
        %v690 = vcombine.low %v657, %v673
        %v691 = vcombine.high %v657, %v673
        %v693 = vunpack.c.l.s4 1934713408
        %v694 = vunpack.c.0.s8 %v693
        %v695 = vlaneseq
        %v696 = vshrl.u32 %v695, 7
        %v697 = vsub.s32 %v694, %v696
        %v698 = vrot.slane %v690, %v697
        %v700 = vunpack.c.l.s4 1934713408
        %v701 = vunpack.c.0.s8 %v700
        %v702 = vlaneseq
        %v703 = vshrl.u32 %v702, 7
        %v704 = vsub.s32 %v701, %v703
        %v705 = vrot.slane %v691, %v704
        %v706 = vcombine.high %v682, 0.0
        %v707 = vcombine.high %v689, 0.0
        %v708 = vcombine.high %v698, 0.0
        %v709 = vcombine.high %v705, 0.0
        %v710 = vpack.c.bf16 %v682, %v682
        %v711 = vpack.c.bf16 %v706, %v706
        %v712 = vpack.c.bf16 %v689, %v689
        %v713 = vpack.c.bf16 %v707, %v707
        %v714 = vpack.c.bf16 %v698, %v698
        %v715 = vpack.c.bf16 %v708, %v708
        %v716 = vpack.c.bf16 %v705, %v705
        %v717 = vpack.c.bf16 %v709, %v709
        %718 = vrot.lane.b32.xlu0 %v539, 64
        %v719 = vpop.permute.xlu0 %718
        %720 = vrot.lane.b32.xlu0 %v546, 64
        %v721 = vpop.permute.xlu0 %720
        %722 = vrot.lane.b32.xlu0 %v549, 64
        %v723 = vpop.permute.xlu0 %722
        %724 = vrot.lane.b32.xlu0 %v552, 64
        %v725 = vpop.permute.xlu0 %724
        %v730 = vcombine.low %v719, %v723
        %v731 = vcombine.high %v719, %v723
        %v733 = vunpack.c.l.s4 1983009808
        %v734 = vunpack.c.0.s8 %v733
        %v735 = vlaneseq
        %v736 = vshrl.u32 %v735, 7
        %v737 = vsub.s32 %v734, %v736
        %v738 = vrot.slane %v730, %v737
        %v740 = vunpack.c.l.s4 1983009808
        %v741 = vunpack.c.0.s8 %v740
        %v742 = vlaneseq
        %v743 = vshrl.u32 %v742, 7
        %v744 = vsub.s32 %v741, %v743
        %v745 = vrot.slane %v731, %v744
        %v746 = vcombine.low %v721, %v725
        %v747 = vcombine.high %v721, %v725
        %v749 = vunpack.c.l.s4 1983009808
        %v750 = vunpack.c.0.s8 %v749
        %v751 = vlaneseq
        %v752 = vshrl.u32 %v751, 7
        %v753 = vsub.s32 %v750, %v752
        %v754 = vrot.slane %v746, %v753
        %v756 = vunpack.c.l.s4 1983009808
        %v757 = vunpack.c.0.s8 %v756
        %v758 = vlaneseq
        %v759 = vshrl.u32 %v758, 7
        %v760 = vsub.s32 %v757, %v759
        %v761 = vrot.slane %v747, %v760
        %v762 = vcombine.low %v738, %v754
        %v763 = vcombine.high %v738, %v754
        %v765 = vunpack.c.l.s4 1934713408
        %v766 = vunpack.c.0.s8 %v765
        %v767 = vlaneseq
        %v768 = vshrl.u32 %v767, 7
        %v769 = vsub.s32 %v766, %v768
        %v770 = vrot.slane %v762, %v769
        %v772 = vunpack.c.l.s4 1934713408
        %v773 = vunpack.c.0.s8 %v772
        %v774 = vlaneseq
        %v775 = vshrl.u32 %v774, 7
        %v776 = vsub.s32 %v773, %v775
        %v777 = vrot.slane %v763, %v776
        %v778 = vcombine.low %v745, %v761
        %v779 = vcombine.high %v745, %v761
        %v781 = vunpack.c.l.s4 1934713408
        %v782 = vunpack.c.0.s8 %v781
        %v783 = vlaneseq
        %v784 = vshrl.u32 %v783, 7
        %v785 = vsub.s32 %v782, %v784
        %v786 = vrot.slane %v778, %v785
        %v788 = vunpack.c.l.s4 1934713408
        %v789 = vunpack.c.0.s8 %v788
        %v790 = vlaneseq
        %v791 = vshrl.u32 %v790, 7
        %v792 = vsub.s32 %v789, %v791
        %v793 = vrot.slane %v779, %v792
        %v794 = vcombine.high %v770, 0.0
        %v795 = vcombine.high %v777, 0.0
        %v796 = vcombine.high %v786, 0.0
        %v797 = vcombine.high %v793, 0.0
        %v798 = vpack.c.bf16 %v770, %v770
        %v799 = vpack.c.bf16 %v794, %v794
        %v800 = vpack.c.bf16 %v777, %v777
        %v801 = vpack.c.bf16 %v795, %v795
        %v802 = vpack.c.bf16 %v786, %v786
        %v803 = vpack.c.bf16 %v796, %v796
        %v804 = vpack.c.bf16 %v793, %v793
        %v805 = vpack.c.bf16 %v797, %v797
        %v806 = vcombine.low %v622, %v626
        %v808 = vunpack.c.l.s4 1983009808
        %v809 = vunpack.c.0.s8 %v808
        %v810 = vlaneseq
        %v811 = vshrl.u32 %v810, 7
        %v812 = vsub.s32 %v809, %v811
        %v813 = vrot.slane %v806, %v812
        %v814 = vcombine.low %v624, %v628
        %v816 = vunpack.c.l.s4 1983009808
        %v817 = vunpack.c.0.s8 %v816
        %v818 = vlaneseq
        %v819 = vshrl.u32 %v818, 7
        %v820 = vsub.s32 %v817, %v819
        %v821 = vrot.slane %v814, %v820
        %v822 = vcombine.low %v813, %v821
        %v824 = vunpack.c.l.s4 1934713408
        %v825 = vunpack.c.0.s8 %v824
        %v826 = vlaneseq
        %v827 = vshrl.u32 %v826, 7
        %v828 = vsub.s32 %v825, %v827
        %v829 = vrot.slane %v822, %v828
        %v830 = vcombine.high %v829, 0
        %v831 = vcombine.low %v623, %v627
        %v833 = vunpack.c.l.s4 1983009808
        %v834 = vunpack.c.0.s8 %v833
        %v835 = vlaneseq
        %v836 = vshrl.u32 %v835, 7
        %v837 = vsub.s32 %v834, %v836
        %v838 = vrot.slane %v831, %v837
        %v839 = vcombine.low %v625, %v629
        %v841 = vunpack.c.l.s4 1983009808
        %v842 = vunpack.c.0.s8 %v841
        %v843 = vlaneseq
        %v844 = vshrl.u32 %v843, 7
        %v845 = vsub.s32 %v842, %v844
        %v846 = vrot.slane %v839, %v845
        %v847 = vcombine.low %v838, %v846
        %v849 = vunpack.c.l.s4 1934713408
        %v850 = vunpack.c.0.s8 %v849
        %v851 = vlaneseq
        %v852 = vshrl.u32 %v851, 7
        %v853 = vsub.s32 %v850, %v852
        %v854 = vrot.slane %v847, %v853
        %v855 = vcombine.high %v854, 0
        %v858 = vpack.i.b16 %v854, %v829
        %v859 = vshrl.u32 %v829, 16
        %v860 = vshrl.u32 %v854, 16
        %v861 = vpack.i.b16 %v860, %v859
        %v864 = vpack.i.b16 %v855, %v830
        %v865 = vshrl.u32 %v830, 16
        %v866 = vshrl.u32 %v855, 16
        %v867 = vpack.i.b16 %v866, %v865
        %868 = vxpose.xlu0.c.b16.start [1/8] %v710, 128
        %869 = vxpose.xlu0.c.b16.cont [2/8] 0, 128
        %870 = vxpose.xlu0.c.b16.cont [3/8] 0, 128
        %871 = vxpose.xlu0.c.b16.cont [4/8] 0, 128
        %872 = vxpose.xlu0.c.b16.cont [5/8] 0, 128
        %873 = vxpose.xlu0.c.b16.cont [6/8] 0, 128
        %874 = vxpose.xlu0.c.b16.cont [7/8] 0, 128
        %875 = vxpose.xlu0.c.b16.end [8/8] 0, 128
        %v876 = vpop.trf.xlu0
        %v877 = vpop.trf.xlu0
        %v878 = vpop.trf.xlu0
        %v879 = vpop.trf.xlu0
        %v880 = vpop.trf.xlu0
        %v881 = vpop.trf.xlu0
        %v882 = vpop.trf.xlu0
        %v883 = vpop.trf.xlu0
        %884 = vxpose.xlu0.c.b16.start [1/8] %v711, 128
        %885 = vxpose.xlu0.c.b16.cont [2/8] 0, 128
        %886 = vxpose.xlu0.c.b16.cont [3/8] 0, 128
        %887 = vxpose.xlu0.c.b16.cont [4/8] 0, 128
        %888 = vxpose.xlu0.c.b16.cont [5/8] 0, 128
        %889 = vxpose.xlu0.c.b16.cont [6/8] 0, 128
        %890 = vxpose.xlu0.c.b16.cont [7/8] 0, 128
        %891 = vxpose.xlu0.c.b16.end [8/8] 0, 128
        %v892 = vpop.trf.xlu0
        %v893 = vpop.trf.xlu0
        %v894 = vpop.trf.xlu0
        %v895 = vpop.trf.xlu0
        %v896 = vpop.trf.xlu0
        %v897 = vpop.trf.xlu0
        %v898 = vpop.trf.xlu0
        %v899 = vpop.trf.xlu0
        %900 = vxpose.xlu0.c.b16.start [1/8] %v712, 128
        %901 = vxpose.xlu0.c.b16.cont [2/8] 0, 128
        %902 = vxpose.xlu0.c.b16.cont [3/8] 0, 128
        %903 = vxpose.xlu0.c.b16.cont [4/8] 0, 128
        %904 = vxpose.xlu0.c.b16.cont [5/8] 0, 128
        %905 = vxpose.xlu0.c.b16.cont [6/8] 0, 128
        %906 = vxpose.xlu0.c.b16.cont [7/8] 0, 128
        %907 = vxpose.xlu0.c.b16.end [8/8] 0, 128
        %v908 = vpop.trf.xlu0
        %v909 = vpop.trf.xlu0
        %v910 = vpop.trf.xlu0
        %v911 = vpop.trf.xlu0
        %v912 = vpop.trf.xlu0
        %v913 = vpop.trf.xlu0
        %v914 = vpop.trf.xlu0
        %v915 = vpop.trf.xlu0
        %916 = vxpose.xlu0.c.b16.start [1/8] %v713, 128
        %917 = vxpose.xlu0.c.b16.cont [2/8] 0, 128
        %918 = vxpose.xlu0.c.b16.cont [3/8] 0, 128
        %919 = vxpose.xlu0.c.b16.cont [4/8] 0, 128
        %920 = vxpose.xlu0.c.b16.cont [5/8] 0, 128
        %921 = vxpose.xlu0.c.b16.cont [6/8] 0, 128
        %922 = vxpose.xlu0.c.b16.cont [7/8] 0, 128
        %923 = vxpose.xlu0.c.b16.end [8/8] 0, 128
        %v924 = vpop.trf.xlu0
        %v925 = vpop.trf.xlu0
        %v926 = vpop.trf.xlu0
        %v927 = vpop.trf.xlu0
        %v928 = vpop.trf.xlu0
        %v929 = vpop.trf.xlu0
        %v930 = vpop.trf.xlu0
        %v931 = vpop.trf.xlu0
        %932 = vxpose.xlu0.c.b16.start [1/8] %v714, 128
        %933 = vxpose.xlu0.c.b16.cont [2/8] 0, 128
        %934 = vxpose.xlu0.c.b16.cont [3/8] 0, 128
        %935 = vxpose.xlu0.c.b16.cont [4/8] 0, 128
        %936 = vxpose.xlu0.c.b16.cont [5/8] 0, 128
        %937 = vxpose.xlu0.c.b16.cont [6/8] 0, 128
        %938 = vxpose.xlu0.c.b16.cont [7/8] 0, 128
        %939 = vxpose.xlu0.c.b16.end [8/8] 0, 128
        %v940 = vpop.trf.xlu0
        %v941 = vpop.trf.xlu0
        %v942 = vpop.trf.xlu0
        %v943 = vpop.trf.xlu0
        %v944 = vpop.trf.xlu0
        %v945 = vpop.trf.xlu0
        %v946 = vpop.trf.xlu0
        %v947 = vpop.trf.xlu0
        %948 = vxpose.xlu0.c.b16.start [1/8] %v715, 128
        %949 = vxpose.xlu0.c.b16.cont [2/8] 0, 128
        %950 = vxpose.xlu0.c.b16.cont [3/8] 0, 128
        %951 = vxpose.xlu0.c.b16.cont [4/8] 0, 128
        %952 = vxpose.xlu0.c.b16.cont [5/8] 0, 128
        %953 = vxpose.xlu0.c.b16.cont [6/8] 0, 128
        %954 = vxpose.xlu0.c.b16.cont [7/8] 0, 128
        %955 = vxpose.xlu0.c.b16.end [8/8] 0, 128
        %v956 = vpop.trf.xlu0
        %v957 = vpop.trf.xlu0
        %v958 = vpop.trf.xlu0
        %v959 = vpop.trf.xlu0
        %v960 = vpop.trf.xlu0
        %v961 = vpop.trf.xlu0
        %v962 = vpop.trf.xlu0
        %v963 = vpop.trf.xlu0
        %964 = vxpose.xlu0.c.b16.start [1/8] %v716, 128
        %965 = vxpose.xlu0.c.b16.cont [2/8] 0, 128
        %966 = vxpose.xlu0.c.b16.cont [3/8] 0, 128
        %967 = vxpose.xlu0.c.b16.cont [4/8] 0, 128
        %968 = vxpose.xlu0.c.b16.cont [5/8] 0, 128
        %969 = vxpose.xlu0.c.b16.cont [6/8] 0, 128
        %970 = vxpose.xlu0.c.b16.cont [7/8] 0, 128
        %971 = vxpose.xlu0.c.b16.end [8/8] 0, 128
        %v972 = vpop.trf.xlu0
        %v973 = vpop.trf.xlu0
        %v974 = vpop.trf.xlu0
        %v975 = vpop.trf.xlu0
        %v976 = vpop.trf.xlu0
        %v977 = vpop.trf.xlu0
        %v978 = vpop.trf.xlu0
        %v979 = vpop.trf.xlu0
        %980 = vxpose.xlu0.c.b16.start [1/8] %v717, 128
        %981 = vxpose.xlu0.c.b16.cont [2/8] 0, 128
        %982 = vxpose.xlu0.c.b16.cont [3/8] 0, 128
        %983 = vxpose.xlu0.c.b16.cont [4/8] 0, 128
        %984 = vxpose.xlu0.c.b16.cont [5/8] 0, 128
        %985 = vxpose.xlu0.c.b16.cont [6/8] 0, 128
        %986 = vxpose.xlu0.c.b16.cont [7/8] 0, 128
        %987 = vxpose.xlu0.c.b16.end [8/8] 0, 128
        %v988 = vpop.trf.xlu0
        %v989 = vpop.trf.xlu0
        %v990 = vpop.trf.xlu0
        %v991 = vpop.trf.xlu0
        %v992 = vpop.trf.xlu0
        %v993 = vpop.trf.xlu0
        %v994 = vpop.trf.xlu0
        %v995 = vpop.trf.xlu0
        %v996 = vcombine.low %v876, %v940
        %v998 = vunpack.c.l.s4 1983009808
        %v999 = vunpack.c.0.s8 %v998
        %v1000 = vlaneseq
        %v1001 = vshrl.u32 %v1000, 7
        %v1002 = vsub.s32 %v999, %v1001
        %v1003 = vrot.slane %v996, %v1002
        %v1004 = vcombine.low %v908, %v972
        %v1006 = vunpack.c.l.s4 1983009808
        %v1007 = vunpack.c.0.s8 %v1006
        %v1008 = vlaneseq
        %v1009 = vshrl.u32 %v1008, 7
        %v1010 = vsub.s32 %v1007, %v1009
        %v1011 = vrot.slane %v1004, %v1010
        %v1012 = vcombine.low %v1003, %v1011
        %v1013 = vcombine.high %v1003, %v1011
        %v1015 = vunpack.c.l.s4 1934713408
        %v1016 = vunpack.c.0.s8 %v1015
        %v1017 = vlaneseq
        %v1018 = vshrl.u32 %v1017, 7
        %v1019 = vsub.s32 %v1016, %v1018
        %v1020 = vrot.slane %v1012, %v1019
        %v1022 = vunpack.c.l.s4 1934713408
        %v1023 = vunpack.c.0.s8 %v1022
        %v1024 = vlaneseq
        %v1025 = vshrl.u32 %v1024, 7
        %v1026 = vsub.s32 %v1023, %v1025
        %v1027 = vrot.slane %v1013, %v1026
        %v1028 = vcombine.high %v1020, 0
        %v1029 = vcombine.high %v1027, 0
        %v1030 = vcombine.low %v892, %v956
        %v1032 = vunpack.c.l.s4 1983009808
        %v1033 = vunpack.c.0.s8 %v1032
        %v1034 = vlaneseq
        %v1035 = vshrl.u32 %v1034, 7
        %v1036 = vsub.s32 %v1033, %v1035
        %v1037 = vrot.slane %v1030, %v1036
        %v1038 = vcombine.low %v924, %v988
        %v1040 = vunpack.c.l.s4 1983009808
        %v1041 = vunpack.c.0.s8 %v1040
        %v1042 = vlaneseq
        %v1043 = vshrl.u32 %v1042, 7
        %v1044 = vsub.s32 %v1041, %v1043
        %v1045 = vrot.slane %v1038, %v1044
        %v1046 = vcombine.low %v1037, %v1045
        %v1047 = vcombine.high %v1037, %v1045
        %v1049 = vunpack.c.l.s4 1934713408
        %v1050 = vunpack.c.0.s8 %v1049
        %v1051 = vlaneseq
        %v1052 = vshrl.u32 %v1051, 7
        %v1053 = vsub.s32 %v1050, %v1052
        %v1054 = vrot.slane %v1046, %v1053
        %v1056 = vunpack.c.l.s4 1934713408
        %v1057 = vunpack.c.0.s8 %v1056
        %v1058 = vlaneseq
        %v1059 = vshrl.u32 %v1058, 7
        %v1060 = vsub.s32 %v1057, %v1059
        %v1061 = vrot.slane %v1047, %v1060
        %v1062 = vcombine.high %v1054, 0
        %v1063 = vcombine.high %v1061, 0
        %v1066 = vpack.i.b16 %v1054, %v1020
        %v1068 = vshrl.u32 %v1020, 16
        %v1069 = vshrl.u32 %v1054, 16
        %v1070 = vpack.i.b16 %v1069, %v1068
        %v1074 = vpack.i.b16 %v1062, %v1028
        %v1076 = vshrl.u32 %v1028, 16
        %v1077 = vshrl.u32 %v1062, 16
        %v1078 = vpack.i.b16 %v1077, %v1076
        %v1082 = vpack.i.b16 %v1061, %v1027
        %v1084 = vshrl.u32 %v1027, 16
        %v1085 = vshrl.u32 %v1061, 16
        %v1086 = vpack.i.b16 %v1085, %v1084
        %v1090 = vpack.i.b16 %v1063, %v1029
        %v1092 = vshrl.u32 %v1029, 16
        %v1093 = vshrl.u32 %v1063, 16
        %v1094 = vpack.i.b16 %v1093, %v1092
        %1096 = vxpose.xlu0.c.b16.start [1/8] %v1066, 128
        %1097 = vxpose.xlu0.c.b16.cont [2/8] 0, 128
        %1098 = vxpose.xlu0.c.b16.cont [3/8] 0, 128
        %1099 = vxpose.xlu0.c.b16.cont [4/8] 0, 128
        %1100 = vxpose.xlu0.c.b16.cont [5/8] 0, 128
        %1101 = vxpose.xlu0.c.b16.cont [6/8] 0, 128
        %1102 = vxpose.xlu0.c.b16.cont [7/8] 0, 128
        %1103 = vxpose.xlu0.c.b16.end [8/8] 0, 128
        %v1104 = vpop.trf.xlu0
        %v1105 = vpop.trf.xlu0
        %v1106 = vpop.trf.xlu0
        %v1107 = vpop.trf.xlu0
        %v1108 = vpop.trf.xlu0
        %v1109 = vpop.trf.xlu0
        %v1110 = vpop.trf.xlu0
        %v1111 = vpop.trf.xlu0
        %1112 = vxpose.xlu0.c.b16.start [1/8] %v1070, 128
        %1113 = vxpose.xlu0.c.b16.cont [2/8] 0, 128
        %1114 = vxpose.xlu0.c.b16.cont [3/8] 0, 128
        %1115 = vxpose.xlu0.c.b16.cont [4/8] 0, 128
        %1116 = vxpose.xlu0.c.b16.cont [5/8] 0, 128
        %1117 = vxpose.xlu0.c.b16.cont [6/8] 0, 128
        %1118 = vxpose.xlu0.c.b16.cont [7/8] 0, 128
        %1119 = vxpose.xlu0.c.b16.end [8/8] 0, 128
        %v1120 = vpop.trf.xlu0
        %v1121 = vpop.trf.xlu0
        %v1122 = vpop.trf.xlu0
        %v1123 = vpop.trf.xlu0
        %v1124 = vpop.trf.xlu0
        %v1125 = vpop.trf.xlu0
        %v1126 = vpop.trf.xlu0
        %v1127 = vpop.trf.xlu0
        %1128 = vxpose.xlu0.c.b16.start [1/8] %v1074, 128
        %1129 = vxpose.xlu0.c.b16.cont [2/8] 0, 128
        %1130 = vxpose.xlu0.c.b16.cont [3/8] 0, 128
        %1131 = vxpose.xlu0.c.b16.cont [4/8] 0, 128
        %1132 = vxpose.xlu0.c.b16.cont [5/8] 0, 128
        %1133 = vxpose.xlu0.c.b16.cont [6/8] 0, 128
        %1134 = vxpose.xlu0.c.b16.cont [7/8] 0, 128
        %1135 = vxpose.xlu0.c.b16.end [8/8] 0, 128
        %v1136 = vpop.trf.xlu0
        %v1137 = vpop.trf.xlu0
        %v1138 = vpop.trf.xlu0
        %v1139 = vpop.trf.xlu0
        %v1140 = vpop.trf.xlu0
        %v1141 = vpop.trf.xlu0
        %v1142 = vpop.trf.xlu0
        %v1143 = vpop.trf.xlu0
        %1144 = vxpose.xlu0.c.b16.start [1/8] %v1078, 128
        %1145 = vxpose.xlu0.c.b16.cont [2/8] 0, 128
        %1146 = vxpose.xlu0.c.b16.cont [3/8] 0, 128
        %1147 = vxpose.xlu0.c.b16.cont [4/8] 0, 128
        %1148 = vxpose.xlu0.c.b16.cont [5/8] 0, 128
        %1149 = vxpose.xlu0.c.b16.cont [6/8] 0, 128
        %1150 = vxpose.xlu0.c.b16.cont [7/8] 0, 128
        %1151 = vxpose.xlu0.c.b16.end [8/8] 0, 128
        %v1152 = vpop.trf.xlu0
        %v1153 = vpop.trf.xlu0
        %v1154 = vpop.trf.xlu0
        %v1155 = vpop.trf.xlu0
        %v1156 = vpop.trf.xlu0
        %v1157 = vpop.trf.xlu0
        %v1158 = vpop.trf.xlu0
        %v1159 = vpop.trf.xlu0
        %1160 = vxpose.xlu0.c.b16.start [1/8] %v1082, 128
        %1161 = vxpose.xlu0.c.b16.cont [2/8] 0, 128
        %1162 = vxpose.xlu0.c.b16.cont [3/8] 0, 128
        %1163 = vxpose.xlu0.c.b16.cont [4/8] 0, 128
        %1164 = vxpose.xlu0.c.b16.cont [5/8] 0, 128
        %1165 = vxpose.xlu0.c.b16.cont [6/8] 0, 128
        %1166 = vxpose.xlu0.c.b16.cont [7/8] 0, 128
        %1167 = vxpose.xlu0.c.b16.end [8/8] 0, 128
        %v1168 = vpop.trf.xlu0
        %v1169 = vpop.trf.xlu0
        %v1170 = vpop.trf.xlu0
        %v1171 = vpop.trf.xlu0
        %v1172 = vpop.trf.xlu0
        %v1173 = vpop.trf.xlu0
        %v1174 = vpop.trf.xlu0
        %v1175 = vpop.trf.xlu0
        %1176 = vxpose.xlu0.c.b16.start [1/8] %v1086, 128
        %1177 = vxpose.xlu0.c.b16.cont [2/8] 0, 128
        %1178 = vxpose.xlu0.c.b16.cont [3/8] 0, 128
        %1179 = vxpose.xlu0.c.b16.cont [4/8] 0, 128
        %1180 = vxpose.xlu0.c.b16.cont [5/8] 0, 128
        %1181 = vxpose.xlu0.c.b16.cont [6/8] 0, 128
        %1182 = vxpose.xlu0.c.b16.cont [7/8] 0, 128
        %1183 = vxpose.xlu0.c.b16.end [8/8] 0, 128
        %v1184 = vpop.trf.xlu0
        %v1185 = vpop.trf.xlu0
        %v1186 = vpop.trf.xlu0
        %v1187 = vpop.trf.xlu0
        %v1188 = vpop.trf.xlu0
        %v1189 = vpop.trf.xlu0
        %v1190 = vpop.trf.xlu0
        %v1191 = vpop.trf.xlu0
        %1192 = vxpose.xlu0.c.b16.start [1/8] %v1090, 128
        %1193 = vxpose.xlu0.c.b16.cont [2/8] 0, 128
        %1194 = vxpose.xlu0.c.b16.cont [3/8] 0, 128
        %1195 = vxpose.xlu0.c.b16.cont [4/8] 0, 128
        %1196 = vxpose.xlu0.c.b16.cont [5/8] 0, 128
        %1197 = vxpose.xlu0.c.b16.cont [6/8] 0, 128
        %1198 = vxpose.xlu0.c.b16.cont [7/8] 0, 128
        %1199 = vxpose.xlu0.c.b16.end [8/8] 0, 128
        %v1200 = vpop.trf.xlu0
        %v1201 = vpop.trf.xlu0
        %v1202 = vpop.trf.xlu0
        %v1203 = vpop.trf.xlu0
        %v1204 = vpop.trf.xlu0
        %v1205 = vpop.trf.xlu0
        %v1206 = vpop.trf.xlu0
        %v1207 = vpop.trf.xlu0
        %1208 = vxpose.xlu0.c.b16.start [1/8] %v1094, 128
        %1209 = vxpose.xlu0.c.b16.cont [2/8] 0, 128
        %1210 = vxpose.xlu0.c.b16.cont [3/8] 0, 128
        %1211 = vxpose.xlu0.c.b16.cont [4/8] 0, 128
        %1212 = vxpose.xlu0.c.b16.cont [5/8] 0, 128
        %1213 = vxpose.xlu0.c.b16.cont [6/8] 0, 128
        %1214 = vxpose.xlu0.c.b16.cont [7/8] 0, 128
        %1215 = vxpose.xlu0.c.b16.end [8/8] 0, 128
        %v1216 = vpop.trf.xlu0
        %v1217 = vpop.trf.xlu0
        %v1218 = vpop.trf.xlu0
        %v1219 = vpop.trf.xlu0
        %v1220 = vpop.trf.xlu0
        %v1221 = vpop.trf.xlu0
        %v1222 = vpop.trf.xlu0
        %v1223 = vpop.trf.xlu0
        %v1224 = vcombine.low %v1104, %v1168
        %v1226 = vunpack.c.l.s4 1983009808
        %v1227 = vunpack.c.0.s8 %v1226
        %v1228 = vlaneseq
        %v1229 = vshrl.u32 %v1228, 7
        %v1230 = vsub.s32 %v1227, %v1229
        %v1231 = vrot.slane %v1224, %v1230
        %v1232 = vcombine.low %v1136, %v1200
        %v1234 = vunpack.c.l.s4 1983009808
        %v1235 = vunpack.c.0.s8 %v1234
        %v1236 = vlaneseq
        %v1237 = vshrl.u32 %v1236, 7
        %v1238 = vsub.s32 %v1235, %v1237
        %v1239 = vrot.slane %v1232, %v1238
        %v1240 = vcombine.low %v1231, %v1239
        %v1242 = vunpack.c.l.s4 1934713408
        %v1243 = vunpack.c.0.s8 %v1242
        %v1244 = vlaneseq
        %v1245 = vshrl.u32 %v1244, 7
        %v1246 = vsub.s32 %v1243, %v1245
        %v1247 = vrot.slane %v1240, %v1246
        %v1248 = vcombine.high %v1247, 0
        %v1249 = vcombine.low %v1120, %v1184
        %v1251 = vunpack.c.l.s4 1983009808
        %v1252 = vunpack.c.0.s8 %v1251
        %v1253 = vlaneseq
        %v1254 = vshrl.u32 %v1253, 7
        %v1255 = vsub.s32 %v1252, %v1254
        %v1256 = vrot.slane %v1249, %v1255
        %v1257 = vcombine.low %v1152, %v1216
        %v1259 = vunpack.c.l.s4 1983009808
        %v1260 = vunpack.c.0.s8 %v1259
        %v1261 = vlaneseq
        %v1262 = vshrl.u32 %v1261, 7
        %v1263 = vsub.s32 %v1260, %v1262
        %v1264 = vrot.slane %v1257, %v1263
        %v1265 = vcombine.low %v1256, %v1264
        %v1267 = vunpack.c.l.s4 1934713408
        %v1268 = vunpack.c.0.s8 %v1267
        %v1269 = vlaneseq
        %v1270 = vshrl.u32 %v1269, 7
        %v1271 = vsub.s32 %v1268, %v1270
        %v1272 = vrot.slane %v1265, %v1271
        %v1273 = vcombine.high %v1272, 0
        %v1276 = vpack.i.b16 %v1272, %v1247
        %v1277 = vshrl.u32 %v1247, 16
        %v1278 = vshrl.u32 %v1272, 16
        %v1279 = vpack.i.b16 %v1278, %v1277
        %v1282 = vpack.i.b16 %v1273, %v1248
        %v1283 = vshrl.u32 %v1248, 16
        %v1284 = vshrl.u32 %v1273, 16
        %v1285 = vpack.i.b16 %v1284, %v1283
        %vm1286 = vcmask 64512
        %v1288 = vsel %vm1286, %v858, 0
        %vm1290 = vcmask 1043456
        %v1292 = vsel %vm1290, %v1276, 0
        %1294 = vmatprep.subr.bf16.mxu0 0
        %1295 = vmatpush1.bf16.msra.mxu0 %v1292
        %1296 = vmatprep.subr.bf16.mxu0 0
        %1297 = vmatpush1.bf16.msra.mxu0 0
        %1298 = vmatprep.subr.bf16.mxu0 0
        %1299 = vmatpush1.bf16.msra.mxu0 0
        %1300 = vmatprep.subr.bf16.mxu0 0
        %1301 = vmatpush1.bf16.msra.mxu0 0
        %1302 = vmatprep.subr.bf16.mxu0 0
        %1303 = vmatpush1.bf16.msra.mxu0 0
        %1304 = vmatprep.subr.bf16.mxu0 0
        %1305 = vmatpush1.bf16.msra.mxu0 0
        %1306 = vmatprep.subr.bf16.mxu0 0
        %1307 = vmatpush1.bf16.msra.mxu0 0
        %1308 = vmatprep.subr.bf16.mxu0 0
        %1309 = vmatpush1.bf16.msra.mxu0 0
        %1310 = vmatprep.subr.bf16.mxu0 0
        %1311 = vmatpush1.bf16.msra.mxu0 0
        %1312 = vmatprep.subr.bf16.mxu0 0
        %1313 = vmatpush1.bf16.msra.mxu0 0
        %1314 = vmatprep.subr.bf16.mxu0 0
        %1315 = vmatpush1.bf16.msra.mxu0 0
        %1316 = vmatprep.subr.bf16.mxu0 0
        %1317 = vmatpush1.bf16.msra.mxu0 0
        %1318 = vmatprep.subr.bf16.mxu0 0
        %1319 = vmatpush1.bf16.msra.mxu0 0
        %1320 = vmatprep.subr.bf16.mxu0 0
        %1321 = vmatpush1.bf16.msra.mxu0 0
        %1322 = vmatprep.subr.bf16.mxu0 0
        %1323 = vmatpush1.bf16.msra.mxu0 0
        %1324 = vmatprep.subr.bf16.mxu0 0
        %1325 = vmatpush1.bf16.msra.mxu0 0
        %1326 = vmatprep.mubr.bf16.mxu0 0
        %1327 = vmatmul.mubr.bf16.gmra.mrb[0].mxu0 %v1288
        %v1328 = vpop.f32.mrb[0].mxu0
        %v1329 = vadd.f32 0.0, %v1328
        %v1330 = vpop.f32.mrb[0].mxu0
        %v1331 = vpop.f32.mrb[0].mxu0
        %v1332 = vpop.f32.mrb[0].mxu0
        %1333 = vdwg.mxu0
        %v1335 = vsel %vm1286, %v861, 0
        %v1338 = vsel %vm1290, %v1279, 0
        %1340 = vmatprep.subr.bf16.mxu0 0
        %1341 = vmatpush1.bf16.msra.mxu0 %v1338
        %1342 = vmatprep.subr.bf16.mxu0 0
        %1343 = vmatpush1.bf16.msra.mxu0 0
        %1344 = vmatprep.subr.bf16.mxu0 0
        %1345 = vmatpush1.bf16.msra.mxu0 0
        %1346 = vmatprep.subr.bf16.mxu0 0
        %1347 = vmatpush1.bf16.msra.mxu0 0
        %1348 = vmatprep.subr.bf16.mxu0 0
        %1349 = vmatpush1.bf16.msra.mxu0 0
        %1350 = vmatprep.subr.bf16.mxu0 0
        %1351 = vmatpush1.bf16.msra.mxu0 0
        %1352 = vmatprep.subr.bf16.mxu0 0
        %1353 = vmatpush1.bf16.msra.mxu0 0
        %1354 = vmatprep.subr.bf16.mxu0 0
        %1355 = vmatpush1.bf16.msra.mxu0 0
        %1356 = vmatprep.subr.bf16.mxu0 0
        %1357 = vmatpush1.bf16.msra.mxu0 0
        %1358 = vmatprep.subr.bf16.mxu0 0
        %1359 = vmatpush1.bf16.msra.mxu0 0
        %1360 = vmatprep.subr.bf16.mxu0 0
        %1361 = vmatpush1.bf16.msra.mxu0 0
        %1362 = vmatprep.subr.bf16.mxu0 0
        %1363 = vmatpush1.bf16.msra.mxu0 0
        %1364 = vmatprep.subr.bf16.mxu0 0
        %1365 = vmatpush1.bf16.msra.mxu0 0
        %1366 = vmatprep.subr.bf16.mxu0 0
        %1367 = vmatpush1.bf16.msra.mxu0 0
        %1368 = vmatprep.subr.bf16.mxu0 0
        %1369 = vmatpush1.bf16.msra.mxu0 0
        %1370 = vmatprep.subr.bf16.mxu0 0
        %1371 = vmatpush1.bf16.msra.mxu0 0
        %1372 = vmatprep.mubr.bf16.mxu0 0
        %1373 = vmatmul.mubr.bf16.gmra.mrb[0].mxu0 %v1335
        %v1374 = vpop.f32.mrb[0].mxu0
        %v1375 = vadd.f32 0.0, %v1374
        %v1376 = vpop.f32.mrb[0].mxu0
        %v1377 = vpop.f32.mrb[0].mxu0
        %v1378 = vpop.f32.mrb[0].mxu0
        %1379 = vdwg.mxu0
        %v1381 = vsel %vm1286, %v864, 0
        %v1384 = vsel %vm1290, %v1282, 0
        %1386 = vmatprep.subr.bf16.mxu0 0
        %1387 = vmatpush1.bf16.msra.mxu0 %v1384
        %1388 = vmatprep.subr.bf16.mxu0 0
        %1389 = vmatpush1.bf16.msra.mxu0 0
        %1390 = vmatprep.subr.bf16.mxu0 0
        %1391 = vmatpush1.bf16.msra.mxu0 0
        %1392 = vmatprep.subr.bf16.mxu0 0
        %1393 = vmatpush1.bf16.msra.mxu0 0
        %1394 = vmatprep.subr.bf16.mxu0 0
        %1395 = vmatpush1.bf16.msra.mxu0 0
        %1396 = vmatprep.subr.bf16.mxu0 0
        %1397 = vmatpush1.bf16.msra.mxu0 0
        %1398 = vmatprep.subr.bf16.mxu0 0
        %1399 = vmatpush1.bf16.msra.mxu0 0
        %1400 = vmatprep.subr.bf16.mxu0 0
        %1401 = vmatpush1.bf16.msra.mxu0 0
        %1402 = vmatprep.subr.bf16.mxu0 0
        %1403 = vmatpush1.bf16.msra.mxu0 0
        %1404 = vmatprep.subr.bf16.mxu0 0
        %1405 = vmatpush1.bf16.msra.mxu0 0
        %1406 = vmatprep.subr.bf16.mxu0 0
        %1407 = vmatpush1.bf16.msra.mxu0 0
        %1408 = vmatprep.subr.bf16.mxu0 0
        %1409 = vmatpush1.bf16.msra.mxu0 0
        %1410 = vmatprep.subr.bf16.mxu0 0
        %1411 = vmatpush1.bf16.msra.mxu0 0
        %1412 = vmatprep.subr.bf16.mxu0 0
        %1413 = vmatpush1.bf16.msra.mxu0 0
        %1414 = vmatprep.subr.bf16.mxu0 0
        %1415 = vmatpush1.bf16.msra.mxu0 0
        %1416 = vmatprep.subr.bf16.mxu0 0
        %1417 = vmatpush1.bf16.msra.mxu0 0
        %1418 = vmatprep.mubr.bf16.mxu0 0
        %1419 = vmatmul.mubr.bf16.gmra.mrb[0].mxu0 %v1381
        %v1420 = vpop.f32.mrb[0].mxu0
        %v1421 = vadd.f32 0.0, %v1420
        %v1422 = vpop.f32.mrb[0].mxu0
        %v1423 = vpop.f32.mrb[0].mxu0
        %v1424 = vpop.f32.mrb[0].mxu0
        %1425 = vdwg.mxu0
        %v1427 = vsel %vm1286, %v867, 0
        %v1430 = vsel %vm1290, %v1285, 0
        %1432 = vmatprep.subr.bf16.mxu0 0
        %1433 = vmatpush1.bf16.msra.mxu0 %v1430
        %1434 = vmatprep.subr.bf16.mxu0 0
        %1435 = vmatpush1.bf16.msra.mxu0 0
        %1436 = vmatprep.subr.bf16.mxu0 0
        %1437 = vmatpush1.bf16.msra.mxu0 0
        %1438 = vmatprep.subr.bf16.mxu0 0
        %1439 = vmatpush1.bf16.msra.mxu0 0
        %1440 = vmatprep.subr.bf16.mxu0 0
        %1441 = vmatpush1.bf16.msra.mxu0 0
        %1442 = vmatprep.subr.bf16.mxu0 0
        %1443 = vmatpush1.bf16.msra.mxu0 0
        %1444 = vmatprep.subr.bf16.mxu0 0
        %1445 = vmatpush1.bf16.msra.mxu0 0
        %1446 = vmatprep.subr.bf16.mxu0 0
        %1447 = vmatpush1.bf16.msra.mxu0 0
        %1448 = vmatprep.subr.bf16.mxu0 0
        %1449 = vmatpush1.bf16.msra.mxu0 0
        %1450 = vmatprep.subr.bf16.mxu0 0
        %1451 = vmatpush1.bf16.msra.mxu0 0
        %1452 = vmatprep.subr.bf16.mxu0 0
        %1453 = vmatpush1.bf16.msra.mxu0 0
        %1454 = vmatprep.subr.bf16.mxu0 0
        %1455 = vmatpush1.bf16.msra.mxu0 0
        %1456 = vmatprep.subr.bf16.mxu0 0
        %1457 = vmatpush1.bf16.msra.mxu0 0
        %1458 = vmatprep.subr.bf16.mxu0 0
        %1459 = vmatpush1.bf16.msra.mxu0 0
        %1460 = vmatprep.subr.bf16.mxu0 0
        %1461 = vmatpush1.bf16.msra.mxu0 0
        %1462 = vmatprep.subr.bf16.mxu0 0
        %1463 = vmatpush1.bf16.msra.mxu0 0
        %1464 = vmatprep.mubr.bf16.mxu0 0
        %1465 = vmatmul.mubr.bf16.gmra.mrb[0].mxu0 %v1427
        %v1466 = vpop.f32.mrb[0].mxu0
        %v1467 = vadd.f32 0.0, %v1466
        %v1468 = vpop.f32.mrb[0].mxu0
        %v1469 = vpop.f32.mrb[0].mxu0
        %v1470 = vpop.f32.mrb[0].mxu0
        %1471 = vdwg.mxu0
        %v1472 = vsel %vm1286, %v1329, -inf
        %1473 = vmax.xlane.f32.xlu0 %v1472
        %v1474 = vpop.xlane.xlu0 %1473
        %v1475 = vsel %vm1286, %v1375, -inf
        %1476 = vmax.xlane.f32.xlu0 %v1475
        %v1477 = vpop.xlane.xlu0 %1476
        %v1478 = vsel %vm1286, %v1421, -inf
        %1479 = vmax.xlane.f32.xlu0 %v1478
        %v1480 = vpop.xlane.xlu0 %1479
        %v1481 = vsel %vm1286, %v1467, -inf
        %1482 = vmax.xlane.f32.xlu0 %v1481
        %v1483 = vpop.xlane.xlu0 %1482
        %v1484 = vsub.f32 %v1329, %v1474
        %v1485 = vsub.f32 %v1375, %v1477
        %v1486 = vsub.f32 %v1421, %v1480
        %v1487 = vsub.f32 %v1467, %v1483
        %v1488 = vmul.f32 %v1484, 1.442695
        %v1489 = vpow.pop %v1488
        %v1490 = vmul.f32 %v1485, 1.442695
        %v1491 = vpow.pop %v1490
        %v1492 = vmul.f32 %v1486, 1.442695
        %v1493 = vpow.pop %v1492
        %v1494 = vmul.f32 %v1487, 1.442695
        %v1495 = vpow.pop %v1494
        %v1496 = vsel %vm1286, %v1489, 0.0
        %1497 = vadd.xlane.f32.xlu0 %v1496
        %v1498 = vpop.xlane.xlu0 %1497
        %v1499 = vsel %vm1286, %v1491, 0.0
        %1500 = vadd.xlane.f32.xlu0 %v1499
        %v1501 = vpop.xlane.xlu0 %1500
        %v1502 = vsel %vm1286, %v1493, 0.0
        %1503 = vadd.xlane.f32.xlu0 %v1502
        %v1504 = vpop.xlane.xlu0 %1503
        %v1505 = vsel %vm1286, %v1495, 0.0
        %1506 = vadd.xlane.f32.xlu0 %v1505
        %v1507 = vpop.xlane.xlu0 %1506
        %v1508 = vrcp.pop %v1498
        %v1509 = vrcp.pop %v1501
        %v1510 = vrcp.pop %v1504
        %v1511 = vrcp.pop %v1507
        %v1512 = vmul.f32 %v1489, %v1508
        %v1513 = vmul.f32 %v1491, %v1509
        %v1514 = vmul.f32 %v1493, %v1510
        %v1515 = vmul.f32 %v1495, %v1511
        %v1516 = vpack.c.bf16 %v1512, %v1512
        %v1517 = vpack.c.bf16 %v1513, %v1513
        %v1518 = vpack.c.bf16 %v1514, %v1514
        %v1519 = vpack.c.bf16 %v1515, %v1515
        %1520 = vxpose.xlu0.c.b16.start [1/8] %v798, 128
        %1521 = vxpose.xlu0.c.b16.cont [2/8] 0, 128
        %1522 = vxpose.xlu0.c.b16.cont [3/8] 0, 128
        %1523 = vxpose.xlu0.c.b16.cont [4/8] 0, 128
        %1524 = vxpose.xlu0.c.b16.cont [5/8] 0, 128
        %1525 = vxpose.xlu0.c.b16.cont [6/8] 0, 128
        %1526 = vxpose.xlu0.c.b16.cont [7/8] 0, 128
        %1527 = vxpose.xlu0.c.b16.end [8/8] 0, 128
        %v1528 = vpop.trf.xlu0
        %v1529 = vpop.trf.xlu0
        %v1530 = vpop.trf.xlu0
        %v1531 = vpop.trf.xlu0
        %v1532 = vpop.trf.xlu0
        %v1533 = vpop.trf.xlu0
        %v1534 = vpop.trf.xlu0
        %v1535 = vpop.trf.xlu0
        %1536 = vxpose.xlu0.c.b16.start [1/8] %v799, 128
        %1537 = vxpose.xlu0.c.b16.cont [2/8] 0, 128
        %1538 = vxpose.xlu0.c.b16.cont [3/8] 0, 128
        %1539 = vxpose.xlu0.c.b16.cont [4/8] 0, 128
        %1540 = vxpose.xlu0.c.b16.cont [5/8] 0, 128
        %1541 = vxpose.xlu0.c.b16.cont [6/8] 0, 128
        %1542 = vxpose.xlu0.c.b16.cont [7/8] 0, 128
        %1543 = vxpose.xlu0.c.b16.end [8/8] 0, 128
        %v1544 = vpop.trf.xlu0
        %v1545 = vpop.trf.xlu0
        %v1546 = vpop.trf.xlu0
        %v1547 = vpop.trf.xlu0
        %v1548 = vpop.trf.xlu0
        %v1549 = vpop.trf.xlu0
        %v1550 = vpop.trf.xlu0
        %v1551 = vpop.trf.xlu0
        %1552 = vxpose.xlu0.c.b16.start [1/8] %v800, 128
        %1553 = vxpose.xlu0.c.b16.cont [2/8] 0, 128
        %1554 = vxpose.xlu0.c.b16.cont [3/8] 0, 128
        %1555 = vxpose.xlu0.c.b16.cont [4/8] 0, 128
        %1556 = vxpose.xlu0.c.b16.cont [5/8] 0, 128
        %1557 = vxpose.xlu0.c.b16.cont [6/8] 0, 128
        %1558 = vxpose.xlu0.c.b16.cont [7/8] 0, 128
        %1559 = vxpose.xlu0.c.b16.end [8/8] 0, 128
        %v1560 = vpop.trf.xlu0
        %v1561 = vpop.trf.xlu0
        %v1562 = vpop.trf.xlu0
        %v1563 = vpop.trf.xlu0
        %v1564 = vpop.trf.xlu0
        %v1565 = vpop.trf.xlu0
        %v1566 = vpop.trf.xlu0
        %v1567 = vpop.trf.xlu0
        %1568 = vxpose.xlu0.c.b16.start [1/8] %v801, 128
        %1569 = vxpose.xlu0.c.b16.cont [2/8] 0, 128
        %1570 = vxpose.xlu0.c.b16.cont [3/8] 0, 128
        %1571 = vxpose.xlu0.c.b16.cont [4/8] 0, 128
        %1572 = vxpose.xlu0.c.b16.cont [5/8] 0, 128
        %1573 = vxpose.xlu0.c.b16.cont [6/8] 0, 128
        %1574 = vxpose.xlu0.c.b16.cont [7/8] 0, 128
        %1575 = vxpose.xlu0.c.b16.end [8/8] 0, 128
        %v1576 = vpop.trf.xlu0
        %v1577 = vpop.trf.xlu0
        %v1578 = vpop.trf.xlu0
        %v1579 = vpop.trf.xlu0
        %v1580 = vpop.trf.xlu0
        %v1581 = vpop.trf.xlu0
        %v1582 = vpop.trf.xlu0
        %v1583 = vpop.trf.xlu0
        %1584 = vxpose.xlu0.c.b16.start [1/8] %v802, 128
        %1585 = vxpose.xlu0.c.b16.cont [2/8] 0, 128
        %1586 = vxpose.xlu0.c.b16.cont [3/8] 0, 128
        %1587 = vxpose.xlu0.c.b16.cont [4/8] 0, 128
        %1588 = vxpose.xlu0.c.b16.cont [5/8] 0, 128
        %1589 = vxpose.xlu0.c.b16.cont [6/8] 0, 128
        %1590 = vxpose.xlu0.c.b16.cont [7/8] 0, 128
        %1591 = vxpose.xlu0.c.b16.end [8/8] 0, 128
        %v1592 = vpop.trf.xlu0
        %v1593 = vpop.trf.xlu0
        %v1594 = vpop.trf.xlu0
        %v1595 = vpop.trf.xlu0
        %v1596 = vpop.trf.xlu0
        %v1597 = vpop.trf.xlu0
        %v1598 = vpop.trf.xlu0
        %v1599 = vpop.trf.xlu0
        %1600 = vxpose.xlu0.c.b16.start [1/8] %v803, 128
        %1601 = vxpose.xlu0.c.b16.cont [2/8] 0, 128
        %1602 = vxpose.xlu0.c.b16.cont [3/8] 0, 128
        %1603 = vxpose.xlu0.c.b16.cont [4/8] 0, 128
        %1604 = vxpose.xlu0.c.b16.cont [5/8] 0, 128
        %1605 = vxpose.xlu0.c.b16.cont [6/8] 0, 128
        %1606 = vxpose.xlu0.c.b16.cont [7/8] 0, 128
        %1607 = vxpose.xlu0.c.b16.end [8/8] 0, 128
        %v1608 = vpop.trf.xlu0
        %v1609 = vpop.trf.xlu0
        %v1610 = vpop.trf.xlu0
        %v1611 = vpop.trf.xlu0
        %v1612 = vpop.trf.xlu0
        %v1613 = vpop.trf.xlu0
        %v1614 = vpop.trf.xlu0
        %v1615 = vpop.trf.xlu0
        %1616 = vxpose.xlu0.c.b16.start [1/8] %v804, 128
        %1617 = vxpose.xlu0.c.b16.cont [2/8] 0, 128
        %1618 = vxpose.xlu0.c.b16.cont [3/8] 0, 128
        %1619 = vxpose.xlu0.c.b16.cont [4/8] 0, 128
        %1620 = vxpose.xlu0.c.b16.cont [5/8] 0, 128
        %1621 = vxpose.xlu0.c.b16.cont [6/8] 0, 128
        %1622 = vxpose.xlu0.c.b16.cont [7/8] 0, 128
        %1623 = vxpose.xlu0.c.b16.end [8/8] 0, 128
        %v1624 = vpop.trf.xlu0
        %v1625 = vpop.trf.xlu0
        %v1626 = vpop.trf.xlu0
        %v1627 = vpop.trf.xlu0
        %v1628 = vpop.trf.xlu0
        %v1629 = vpop.trf.xlu0
        %v1630 = vpop.trf.xlu0
        %v1631 = vpop.trf.xlu0
        %1632 = vxpose.xlu0.c.b16.start [1/8] %v805, 128
        %1633 = vxpose.xlu0.c.b16.cont [2/8] 0, 128
        %1634 = vxpose.xlu0.c.b16.cont [3/8] 0, 128
        %1635 = vxpose.xlu0.c.b16.cont [4/8] 0, 128
        %1636 = vxpose.xlu0.c.b16.cont [5/8] 0, 128
        %1637 = vxpose.xlu0.c.b16.cont [6/8] 0, 128
        %1638 = vxpose.xlu0.c.b16.cont [7/8] 0, 128
        %1639 = vxpose.xlu0.c.b16.end [8/8] 0, 128
        %v1640 = vpop.trf.xlu0
        %v1641 = vpop.trf.xlu0
        %v1642 = vpop.trf.xlu0
        %v1643 = vpop.trf.xlu0
        %v1644 = vpop.trf.xlu0
        %v1645 = vpop.trf.xlu0
        %v1646 = vpop.trf.xlu0
        %v1647 = vpop.trf.xlu0
        %v1648 = vcombine.low %v1528, %v1592
        %v1650 = vunpack.c.l.s4 1983009808
        %v1651 = vunpack.c.0.s8 %v1650
        %v1652 = vlaneseq
        %v1653 = vshrl.u32 %v1652, 7
        %v1654 = vsub.s32 %v1651, %v1653
        %v1655 = vrot.slane %v1648, %v1654
        %v1656 = vcombine.low %v1560, %v1624
        %v1658 = vunpack.c.l.s4 1983009808
        %v1659 = vunpack.c.0.s8 %v1658
        %v1660 = vlaneseq
        %v1661 = vshrl.u32 %v1660, 7
        %v1662 = vsub.s32 %v1659, %v1661
        %v1663 = vrot.slane %v1656, %v1662
        %v1664 = vcombine.low %v1655, %v1663
        %v1665 = vcombine.high %v1655, %v1663
        %v1667 = vunpack.c.l.s4 1934713408
        %v1668 = vunpack.c.0.s8 %v1667
        %v1669 = vlaneseq
        %v1670 = vshrl.u32 %v1669, 7
        %v1671 = vsub.s32 %v1668, %v1670
        %v1672 = vrot.slane %v1664, %v1671
        %v1674 = vunpack.c.l.s4 1934713408
        %v1675 = vunpack.c.0.s8 %v1674
        %v1676 = vlaneseq
        %v1677 = vshrl.u32 %v1676, 7
        %v1678 = vsub.s32 %v1675, %v1677
        %v1679 = vrot.slane %v1665, %v1678
        %v1680 = vcombine.high %v1672, 0
        %v1681 = vcombine.high %v1679, 0
        %v1682 = vcombine.low %v1544, %v1608
        %v1684 = vunpack.c.l.s4 1983009808
        %v1685 = vunpack.c.0.s8 %v1684
        %v1686 = vlaneseq
        %v1687 = vshrl.u32 %v1686, 7
        %v1688 = vsub.s32 %v1685, %v1687
        %v1689 = vrot.slane %v1682, %v1688
        %v1690 = vcombine.low %v1576, %v1640
        %v1692 = vunpack.c.l.s4 1983009808
        %v1693 = vunpack.c.0.s8 %v1692
        %v1694 = vlaneseq
        %v1695 = vshrl.u32 %v1694, 7
        %v1696 = vsub.s32 %v1693, %v1695
        %v1697 = vrot.slane %v1690, %v1696
        %v1698 = vcombine.low %v1689, %v1697
        %v1699 = vcombine.high %v1689, %v1697
        %v1701 = vunpack.c.l.s4 1934713408
        %v1702 = vunpack.c.0.s8 %v1701
        %v1703 = vlaneseq
        %v1704 = vshrl.u32 %v1703, 7
        %v1705 = vsub.s32 %v1702, %v1704
        %v1706 = vrot.slane %v1698, %v1705
        %v1708 = vunpack.c.l.s4 1934713408
        %v1709 = vunpack.c.0.s8 %v1708
        %v1710 = vlaneseq
        %v1711 = vshrl.u32 %v1710, 7
        %v1712 = vsub.s32 %v1709, %v1711
        %v1713 = vrot.slane %v1699, %v1712
        %v1714 = vcombine.high %v1706, 0
        %v1715 = vcombine.high %v1713, 0
        %v1718 = vpack.i.b16 %v1706, %v1672
        %v1720 = vshrl.u32 %v1672, 16
        %v1721 = vshrl.u32 %v1706, 16
        %v1722 = vpack.i.b16 %v1721, %v1720
        %v1726 = vpack.i.b16 %v1714, %v1680
        %v1728 = vshrl.u32 %v1680, 16
        %v1729 = vshrl.u32 %v1714, 16
        %v1730 = vpack.i.b16 %v1729, %v1728
        %v1734 = vpack.i.b16 %v1713, %v1679
        %v1736 = vshrl.u32 %v1679, 16
        %v1737 = vshrl.u32 %v1713, 16
        %v1738 = vpack.i.b16 %v1737, %v1736
        %v1742 = vpack.i.b16 %v1715, %v1681
        %v1744 = vshrl.u32 %v1681, 16
        %v1745 = vshrl.u32 %v1715, 16
        %v1746 = vpack.i.b16 %v1745, %v1744
        %1748 = vxpose.xlu0.c.b16.start [1/8] %v1718, 128
        %1749 = vxpose.xlu0.c.b16.cont [2/8] 0, 128
        %1750 = vxpose.xlu0.c.b16.cont [3/8] 0, 128
        %1751 = vxpose.xlu0.c.b16.cont [4/8] 0, 128
        %1752 = vxpose.xlu0.c.b16.cont [5/8] 0, 128
        %1753 = vxpose.xlu0.c.b16.cont [6/8] 0, 128
        %1754 = vxpose.xlu0.c.b16.cont [7/8] 0, 128
        %1755 = vxpose.xlu0.c.b16.end [8/8] 0, 128
        %v1756 = vpop.trf.xlu0
        %v1757 = vpop.trf.xlu0
        %v1758 = vpop.trf.xlu0
        %v1759 = vpop.trf.xlu0
        %v1760 = vpop.trf.xlu0
        %v1761 = vpop.trf.xlu0
        %v1762 = vpop.trf.xlu0
        %v1763 = vpop.trf.xlu0
        %1764 = vxpose.xlu0.c.b16.start [1/8] %v1722, 128
        %1765 = vxpose.xlu0.c.b16.cont [2/8] 0, 128
        %1766 = vxpose.xlu0.c.b16.cont [3/8] 0, 128
        %1767 = vxpose.xlu0.c.b16.cont [4/8] 0, 128
        %1768 = vxpose.xlu0.c.b16.cont [5/8] 0, 128
        %1769 = vxpose.xlu0.c.b16.cont [6/8] 0, 128
        %1770 = vxpose.xlu0.c.b16.cont [7/8] 0, 128
        %1771 = vxpose.xlu0.c.b16.end [8/8] 0, 128
        %v1772 = vpop.trf.xlu0
        %v1773 = vpop.trf.xlu0
        %v1774 = vpop.trf.xlu0
        %v1775 = vpop.trf.xlu0
        %v1776 = vpop.trf.xlu0
        %v1777 = vpop.trf.xlu0
        %v1778 = vpop.trf.xlu0
        %v1779 = vpop.trf.xlu0
        %1780 = vxpose.xlu0.c.b16.start [1/8] %v1726, 128
        %1781 = vxpose.xlu0.c.b16.cont [2/8] 0, 128
        %1782 = vxpose.xlu0.c.b16.cont [3/8] 0, 128
        %1783 = vxpose.xlu0.c.b16.cont [4/8] 0, 128
        %1784 = vxpose.xlu0.c.b16.cont [5/8] 0, 128
        %1785 = vxpose.xlu0.c.b16.cont [6/8] 0, 128
        %1786 = vxpose.xlu0.c.b16.cont [7/8] 0, 128
        %1787 = vxpose.xlu0.c.b16.end [8/8] 0, 128
        %v1788 = vpop.trf.xlu0
        %v1789 = vpop.trf.xlu0
        %v1790 = vpop.trf.xlu0
        %v1791 = vpop.trf.xlu0
        %v1792 = vpop.trf.xlu0
        %v1793 = vpop.trf.xlu0
        %v1794 = vpop.trf.xlu0
        %v1795 = vpop.trf.xlu0
        %1796 = vxpose.xlu0.c.b16.start [1/8] %v1730, 128
        %1797 = vxpose.xlu0.c.b16.cont [2/8] 0, 128
        %1798 = vxpose.xlu0.c.b16.cont [3/8] 0, 128
        %1799 = vxpose.xlu0.c.b16.cont [4/8] 0, 128
        %1800 = vxpose.xlu0.c.b16.cont [5/8] 0, 128
        %1801 = vxpose.xlu0.c.b16.cont [6/8] 0, 128
        %1802 = vxpose.xlu0.c.b16.cont [7/8] 0, 128
        %1803 = vxpose.xlu0.c.b16.end [8/8] 0, 128
        %v1804 = vpop.trf.xlu0
        %v1805 = vpop.trf.xlu0
        %v1806 = vpop.trf.xlu0
        %v1807 = vpop.trf.xlu0
        %v1808 = vpop.trf.xlu0
        %v1809 = vpop.trf.xlu0
        %v1810 = vpop.trf.xlu0
        %v1811 = vpop.trf.xlu0
        %1812 = vxpose.xlu0.c.b16.start [1/8] %v1734, 128
        %1813 = vxpose.xlu0.c.b16.cont [2/8] 0, 128
        %1814 = vxpose.xlu0.c.b16.cont [3/8] 0, 128
        %1815 = vxpose.xlu0.c.b16.cont [4/8] 0, 128
        %1816 = vxpose.xlu0.c.b16.cont [5/8] 0, 128
        %1817 = vxpose.xlu0.c.b16.cont [6/8] 0, 128
        %1818 = vxpose.xlu0.c.b16.cont [7/8] 0, 128
        %1819 = vxpose.xlu0.c.b16.end [8/8] 0, 128
        %v1820 = vpop.trf.xlu0
        %v1821 = vpop.trf.xlu0
        %v1822 = vpop.trf.xlu0
        %v1823 = vpop.trf.xlu0
        %v1824 = vpop.trf.xlu0
        %v1825 = vpop.trf.xlu0
        %v1826 = vpop.trf.xlu0
        %v1827 = vpop.trf.xlu0
        %1828 = vxpose.xlu0.c.b16.start [1/8] %v1738, 128
        %1829 = vxpose.xlu0.c.b16.cont [2/8] 0, 128
        %1830 = vxpose.xlu0.c.b16.cont [3/8] 0, 128
        %1831 = vxpose.xlu0.c.b16.cont [4/8] 0, 128
        %1832 = vxpose.xlu0.c.b16.cont [5/8] 0, 128
        %1833 = vxpose.xlu0.c.b16.cont [6/8] 0, 128
        %1834 = vxpose.xlu0.c.b16.cont [7/8] 0, 128
        %1835 = vxpose.xlu0.c.b16.end [8/8] 0, 128
        %v1836 = vpop.trf.xlu0
        %v1837 = vpop.trf.xlu0
        %v1838 = vpop.trf.xlu0
        %v1839 = vpop.trf.xlu0
        %v1840 = vpop.trf.xlu0
        %v1841 = vpop.trf.xlu0
        %v1842 = vpop.trf.xlu0
        %v1843 = vpop.trf.xlu0
        %1844 = vxpose.xlu0.c.b16.start [1/8] %v1742, 128
        %1845 = vxpose.xlu0.c.b16.cont [2/8] 0, 128
        %1846 = vxpose.xlu0.c.b16.cont [3/8] 0, 128
        %1847 = vxpose.xlu0.c.b16.cont [4/8] 0, 128
        %1848 = vxpose.xlu0.c.b16.cont [5/8] 0, 128
        %1849 = vxpose.xlu0.c.b16.cont [6/8] 0, 128
        %1850 = vxpose.xlu0.c.b16.cont [7/8] 0, 128
        %1851 = vxpose.xlu0.c.b16.end [8/8] 0, 128
        %v1852 = vpop.trf.xlu0
        %v1853 = vpop.trf.xlu0
        %v1854 = vpop.trf.xlu0
        %v1855 = vpop.trf.xlu0
        %v1856 = vpop.trf.xlu0
        %v1857 = vpop.trf.xlu0
        %v1858 = vpop.trf.xlu0
        %v1859 = vpop.trf.xlu0
        %1860 = vxpose.xlu0.c.b16.start [1/8] %v1746, 128
        %1861 = vxpose.xlu0.c.b16.cont [2/8] 0, 128
        %1862 = vxpose.xlu0.c.b16.cont [3/8] 0, 128
        %1863 = vxpose.xlu0.c.b16.cont [4/8] 0, 128
        %1864 = vxpose.xlu0.c.b16.cont [5/8] 0, 128
        %1865 = vxpose.xlu0.c.b16.cont [6/8] 0, 128
        %1866 = vxpose.xlu0.c.b16.cont [7/8] 0, 128
        %1867 = vxpose.xlu0.c.b16.end [8/8] 0, 128
        %v1868 = vpop.trf.xlu0
        %v1869 = vpop.trf.xlu0
        %v1870 = vpop.trf.xlu0
        %v1871 = vpop.trf.xlu0
        %v1872 = vpop.trf.xlu0
        %v1873 = vpop.trf.xlu0
        %v1874 = vpop.trf.xlu0
        %v1875 = vpop.trf.xlu0
        %v1876 = vcombine.low %v1756, %v1820
        %v1878 = vunpack.c.l.s4 1983009808
        %v1879 = vunpack.c.0.s8 %v1878
        %v1880 = vlaneseq
        %v1881 = vshrl.u32 %v1880, 7
        %v1882 = vsub.s32 %v1879, %v1881
        %v1883 = vrot.slane %v1876, %v1882
        %v1884 = vcombine.low %v1788, %v1852
        %v1886 = vunpack.c.l.s4 1983009808
        %v1887 = vunpack.c.0.s8 %v1886
        %v1888 = vlaneseq
        %v1889 = vshrl.u32 %v1888, 7
        %v1890 = vsub.s32 %v1887, %v1889
        %v1891 = vrot.slane %v1884, %v1890
        %v1892 = vcombine.low %v1883, %v1891
        %v1894 = vunpack.c.l.s4 1934713408
        %v1895 = vunpack.c.0.s8 %v1894
        %v1896 = vlaneseq
        %v1897 = vshrl.u32 %v1896, 7
        %v1898 = vsub.s32 %v1895, %v1897
        %v1899 = vrot.slane %v1892, %v1898
        %v1900 = vcombine.high %v1899, 0
        %v1901 = vcombine.low %v1772, %v1836
        %v1903 = vunpack.c.l.s4 1983009808
        %v1904 = vunpack.c.0.s8 %v1903
        %v1905 = vlaneseq
        %v1906 = vshrl.u32 %v1905, 7
        %v1907 = vsub.s32 %v1904, %v1906
        %v1908 = vrot.slane %v1901, %v1907
        %v1909 = vcombine.low %v1804, %v1868
        %v1911 = vunpack.c.l.s4 1983009808
        %v1912 = vunpack.c.0.s8 %v1911
        %v1913 = vlaneseq
        %v1914 = vshrl.u32 %v1913, 7
        %v1915 = vsub.s32 %v1912, %v1914
        %v1916 = vrot.slane %v1909, %v1915
        %v1917 = vcombine.low %v1908, %v1916
        %v1919 = vunpack.c.l.s4 1934713408
        %v1920 = vunpack.c.0.s8 %v1919
        %v1921 = vlaneseq
        %v1922 = vshrl.u32 %v1921, 7
        %v1923 = vsub.s32 %v1920, %v1922
        %v1924 = vrot.slane %v1917, %v1923
        %v1925 = vcombine.high %v1924, 0
        %v1928 = vpack.i.b16 %v1924, %v1899
        %v1929 = vshrl.u32 %v1899, 16
        %v1930 = vshrl.u32 %v1924, 16
        %v1931 = vpack.i.b16 %v1930, %v1929
        %v1934 = vpack.i.b16 %v1925, %v1900
        %v1935 = vshrl.u32 %v1900, 16
        %v1936 = vshrl.u32 %v1925, 16
        %v1937 = vpack.i.b16 %v1936, %v1935
        %v1939 = vsel %vm1286, %v1928, 0
        %v1942 = vsel %vm1286, %v1516, 0
        %1944 = vmatprep.subr.bf16.mxu0 0
        %1945 = vmatpush1.bf16.xpose.msra.mxu0 %v1942
        %1946 = vmatprep.subr.bf16.mxu0 0
        %1947 = vmatpush1.bf16.xpose.msra.mxu0 0
        %1948 = vmatprep.subr.bf16.mxu0 0
        %1949 = vmatpush1.bf16.xpose.msra.mxu0 0
        %1950 = vmatprep.subr.bf16.mxu0 0
        %1951 = vmatpush1.bf16.xpose.msra.mxu0 0
        %1952 = vmatprep.subr.bf16.mxu0 0
        %1953 = vmatpush1.bf16.xpose.msra.mxu0 0
        %1954 = vmatprep.subr.bf16.mxu0 0
        %1955 = vmatpush1.bf16.xpose.msra.mxu0 0
        %1956 = vmatprep.subr.bf16.mxu0 0
        %1957 = vmatpush1.bf16.xpose.msra.mxu0 0
        %1958 = vmatprep.subr.bf16.mxu0 0
        %1959 = vmatpush1.bf16.xpose.msra.mxu0 0
        %1960 = vmatprep.subr.bf16.mxu0 0
        %1961 = vmatpush1.bf16.xpose.msra.mxu0 0
        %1962 = vmatprep.subr.bf16.mxu0 0
        %1963 = vmatpush1.bf16.xpose.msra.mxu0 0
        %1964 = vmatprep.subr.bf16.mxu0 0
        %1965 = vmatpush1.bf16.xpose.msra.mxu0 0
        %1966 = vmatprep.subr.bf16.mxu0 0
        %1967 = vmatpush1.bf16.xpose.msra.mxu0 0
        %1968 = vmatprep.subr.bf16.mxu0 0
        %1969 = vmatpush1.bf16.xpose.msra.mxu0 0
        %1970 = vmatprep.subr.bf16.mxu0 0
        %1971 = vmatpush1.bf16.xpose.msra.mxu0 0
        %1972 = vmatprep.subr.bf16.mxu0 0
        %1973 = vmatpush1.bf16.xpose.msra.mxu0 0
        %1974 = vmatprep.subr.bf16.mxu0 0
        %1975 = vmatpush1.bf16.xpose.msra.mxu0 0
        %1976 = vmatprep.mubr.bf16.mxu0 0
        %1977 = vmatmul.mubr.bf16.gmra.mrb[0].mxu0 %v1939
        %v1978 = vpop.f32.mrb[0].mxu0
        %v1979 = vadd.f32 0.0, %v1978
        %v1980 = vpop.f32.mrb[0].mxu0
        %v1981 = vpop.f32.mrb[0].mxu0
        %v1982 = vpop.f32.mrb[0].mxu0
        %1983 = vdwg.mxu0
        %v1985 = vsel %vm1286, %v1931, 0
        %v1988 = vsel %vm1286, %v1517, 0
        %1990 = vmatprep.subr.bf16.mxu0 0
        %1991 = vmatpush1.bf16.xpose.msra.mxu0 %v1988
        %1992 = vmatprep.subr.bf16.mxu0 0
        %1993 = vmatpush1.bf16.xpose.msra.mxu0 0
        %1994 = vmatprep.subr.bf16.mxu0 0
        %1995 = vmatpush1.bf16.xpose.msra.mxu0 0
        %1996 = vmatprep.subr.bf16.mxu0 0
        %1997 = vmatpush1.bf16.xpose.msra.mxu0 0
        %1998 = vmatprep.subr.bf16.mxu0 0
        %1999 = vmatpush1.bf16.xpose.msra.mxu0 0
        %2000 = vmatprep.subr.bf16.mxu0 0
        %2001 = vmatpush1.bf16.xpose.msra.mxu0 0
        %2002 = vmatprep.subr.bf16.mxu0 0
        %2003 = vmatpush1.bf16.xpose.msra.mxu0 0
        %2004 = vmatprep.subr.bf16.mxu0 0
        %2005 = vmatpush1.bf16.xpose.msra.mxu0 0
        %2006 = vmatprep.subr.bf16.mxu0 0
        %2007 = vmatpush1.bf16.xpose.msra.mxu0 0
        %2008 = vmatprep.subr.bf16.mxu0 0
        %2009 = vmatpush1.bf16.xpose.msra.mxu0 0
        %2010 = vmatprep.subr.bf16.mxu0 0
        %2011 = vmatpush1.bf16.xpose.msra.mxu0 0
        %2012 = vmatprep.subr.bf16.mxu0 0
        %2013 = vmatpush1.bf16.xpose.msra.mxu0 0
        %2014 = vmatprep.subr.bf16.mxu0 0
        %2015 = vmatpush1.bf16.xpose.msra.mxu0 0
        %2016 = vmatprep.subr.bf16.mxu0 0
        %2017 = vmatpush1.bf16.xpose.msra.mxu0 0
        %2018 = vmatprep.subr.bf16.mxu0 0
        %2019 = vmatpush1.bf16.xpose.msra.mxu0 0
        %2020 = vmatprep.subr.bf16.mxu0 0
        %2021 = vmatpush1.bf16.xpose.msra.mxu0 0
        %2022 = vmatprep.mubr.bf16.mxu0 0
        %2023 = vmatmul.mubr.bf16.gmra.mrb[0].mxu0 %v1985
        %v2024 = vpop.f32.mrb[0].mxu0
        %v2025 = vadd.f32 0.0, %v2024
        %v2026 = vpop.f32.mrb[0].mxu0
        %v2027 = vpop.f32.mrb[0].mxu0
        %v2028 = vpop.f32.mrb[0].mxu0
        %2029 = vdwg.mxu0
        %v2031 = vsel %vm1286, %v1934, 0
        %v2034 = vsel %vm1286, %v1518, 0
        %2036 = vmatprep.subr.bf16.mxu0 0
        %2037 = vmatpush1.bf16.xpose.msra.mxu0 %v2034
        %2038 = vmatprep.subr.bf16.mxu0 0
        %2039 = vmatpush1.bf16.xpose.msra.mxu0 0
        %2040 = vmatprep.subr.bf16.mxu0 0
        %2041 = vmatpush1.bf16.xpose.msra.mxu0 0
        %2042 = vmatprep.subr.bf16.mxu0 0
        %2043 = vmatpush1.bf16.xpose.msra.mxu0 0
        %2044 = vmatprep.subr.bf16.mxu0 0
        %2045 = vmatpush1.bf16.xpose.msra.mxu0 0
        %2046 = vmatprep.subr.bf16.mxu0 0
        %2047 = vmatpush1.bf16.xpose.msra.mxu0 0
        %2048 = vmatprep.subr.bf16.mxu0 0
        %2049 = vmatpush1.bf16.xpose.msra.mxu0 0
        %2050 = vmatprep.subr.bf16.mxu0 0
        %2051 = vmatpush1.bf16.xpose.msra.mxu0 0
        %2052 = vmatprep.subr.bf16.mxu0 0
        %2053 = vmatpush1.bf16.xpose.msra.mxu0 0
        %2054 = vmatprep.subr.bf16.mxu0 0
        %2055 = vmatpush1.bf16.xpose.msra.mxu0 0
        %2056 = vmatprep.subr.bf16.mxu0 0
        %2057 = vmatpush1.bf16.xpose.msra.mxu0 0
        %2058 = vmatprep.subr.bf16.mxu0 0
        %2059 = vmatpush1.bf16.xpose.msra.mxu0 0
        %2060 = vmatprep.subr.bf16.mxu0 0
        %2061 = vmatpush1.bf16.xpose.msra.mxu0 0
        %2062 = vmatprep.subr.bf16.mxu0 0
        %2063 = vmatpush1.bf16.xpose.msra.mxu0 0
        %2064 = vmatprep.subr.bf16.mxu0 0
        %2065 = vmatpush1.bf16.xpose.msra.mxu0 0
        %2066 = vmatprep.subr.bf16.mxu0 0
        %2067 = vmatpush1.bf16.xpose.msra.mxu0 0
        %2068 = vmatprep.mubr.bf16.mxu0 0
        %2069 = vmatmul.mubr.bf16.gmra.mrb[0].mxu0 %v2031
        %v2070 = vpop.f32.mrb[0].mxu0
        %v2071 = vadd.f32 0.0, %v2070
        %v2072 = vpop.f32.mrb[0].mxu0
        %v2073 = vpop.f32.mrb[0].mxu0
        %v2074 = vpop.f32.mrb[0].mxu0
        %2075 = vdwg.mxu0
        %v2077 = vsel %vm1286, %v1937, 0
        %v2080 = vsel %vm1286, %v1519, 0
        %2082 = vmatprep.subr.bf16.mxu0 0
        %2083 = vmatpush1.bf16.xpose.msra.mxu0 %v2080
        %2084 = vmatprep.subr.bf16.mxu0 0
        %2085 = vmatpush1.bf16.xpose.msra.mxu0 0
        %2086 = vmatprep.subr.bf16.mxu0 0
        %2087 = vmatpush1.bf16.xpose.msra.mxu0 0
        %2088 = vmatprep.subr.bf16.mxu0 0
        %2089 = vmatpush1.bf16.xpose.msra.mxu0 0
        %2090 = vmatprep.subr.bf16.mxu0 0
        %2091 = vmatpush1.bf16.xpose.msra.mxu0 0
        %2092 = vmatprep.subr.bf16.mxu0 0
        %2093 = vmatpush1.bf16.xpose.msra.mxu0 0
        %2094 = vmatprep.subr.bf16.mxu0 0
        %2095 = vmatpush1.bf16.xpose.msra.mxu0 0
        %2096 = vmatprep.subr.bf16.mxu0 0
        %2097 = vmatpush1.bf16.xpose.msra.mxu0 0
        %2098 = vmatprep.subr.bf16.mxu0 0
        %2099 = vmatpush1.bf16.xpose.msra.mxu0 0
        %2100 = vmatprep.subr.bf16.mxu0 0
        %2101 = vmatpush1.bf16.xpose.msra.mxu0 0
        %2102 = vmatprep.subr.bf16.mxu0 0
        %2103 = vmatpush1.bf16.xpose.msra.mxu0 0
        %2104 = vmatprep.subr.bf16.mxu0 0
        %2105 = vmatpush1.bf16.xpose.msra.mxu0 0
        %2106 = vmatprep.subr.bf16.mxu0 0
        %2107 = vmatpush1.bf16.xpose.msra.mxu0 0
        %2108 = vmatprep.subr.bf16.mxu0 0
        %2109 = vmatpush1.bf16.xpose.msra.mxu0 0
        %2110 = vmatprep.subr.bf16.mxu0 0
        %2111 = vmatpush1.bf16.xpose.msra.mxu0 0
        %2112 = vmatprep.subr.bf16.mxu0 0
        %2113 = vmatpush1.bf16.xpose.msra.mxu0 0
        %2114 = vmatprep.mubr.bf16.mxu0 0
        %2115 = vmatmul.mubr.bf16.gmra.mrb[0].mxu0 %v2077
        %v2116 = vpop.f32.mrb[0].mxu0
        %v2117 = vadd.f32 0.0, %v2116
        %v2118 = vpop.f32.mrb[0].mxu0
        %v2119 = vpop.f32.mrb[0].mxu0
        %v2120 = vpop.f32.mrb[0].mxu0
        %2121 = vdwg.mxu0
        %2122 = vxpose.xlu0.b32.start [1/16] %v1979, 128
        %2123 = vxpose.xlu0.b32.cont [2/16] 0.0, 128
        %2124 = vxpose.xlu0.b32.cont [3/16] 0.0, 128
        %2125 = vxpose.xlu0.b32.cont [4/16] 0.0, 128
        %2126 = vxpose.xlu0.b32.cont [5/16] 0.0, 128
        %2127 = vxpose.xlu0.b32.cont [6/16] 0.0, 128
        %2128 = vxpose.xlu0.b32.cont [7/16] 0.0, 128
        %2129 = vxpose.xlu0.b32.cont [8/16] 0.0, 128
        %2130 = vxpose.xlu0.b32.cont [9/16] 0.0, 128
        %2131 = vxpose.xlu0.b32.cont [10/16] 0.0, 128
        %2132 = vxpose.xlu0.b32.cont [11/16] 0.0, 128
        %2133 = vxpose.xlu0.b32.cont [12/16] 0.0, 128
        %2134 = vxpose.xlu0.b32.cont [13/16] 0.0, 128
        %2135 = vxpose.xlu0.b32.cont [14/16] 0.0, 128
        %2136 = vxpose.xlu0.b32.cont [15/16] 0.0, 128
        %2137 = vxpose.xlu0.b32.end [16/16] 0.0, 128
        %v2138 = vpop.trf.xlu0
        %v2139 = vpop.trf.xlu0
        %v2140 = vpop.trf.xlu0
        %v2141 = vpop.trf.xlu0
        %v2142 = vpop.trf.xlu0
        %v2143 = vpop.trf.xlu0
        %v2144 = vpop.trf.xlu0
        %v2145 = vpop.trf.xlu0
        %v2146 = vpop.trf.xlu0
        %v2147 = vpop.trf.xlu0
        %v2148 = vpop.trf.xlu0
        %v2149 = vpop.trf.xlu0
        %v2150 = vpop.trf.xlu0
        %v2151 = vpop.trf.xlu0
        %v2152 = vpop.trf.xlu0
        %v2153 = vpop.trf.xlu0
        %2154 = vxpose.xlu0.b32.start [1/16] %v2025, 128
        %2155 = vxpose.xlu0.b32.cont [2/16] 0.0, 128
        %2156 = vxpose.xlu0.b32.cont [3/16] 0.0, 128
        %2157 = vxpose.xlu0.b32.cont [4/16] 0.0, 128
        %2158 = vxpose.xlu0.b32.cont [5/16] 0.0, 128
        %2159 = vxpose.xlu0.b32.cont [6/16] 0.0, 128
        %2160 = vxpose.xlu0.b32.cont [7/16] 0.0, 128
        %2161 = vxpose.xlu0.b32.cont [8/16] 0.0, 128
        %2162 = vxpose.xlu0.b32.cont [9/16] 0.0, 128
        %2163 = vxpose.xlu0.b32.cont [10/16] 0.0, 128
        %2164 = vxpose.xlu0.b32.cont [11/16] 0.0, 128
        %2165 = vxpose.xlu0.b32.cont [12/16] 0.0, 128
        %2166 = vxpose.xlu0.b32.cont [13/16] 0.0, 128
        %2167 = vxpose.xlu0.b32.cont [14/16] 0.0, 128
        %2168 = vxpose.xlu0.b32.cont [15/16] 0.0, 128
        %2169 = vxpose.xlu0.b32.end [16/16] 0.0, 128
        %v2170 = vpop.trf.xlu0
        %v2171 = vpop.trf.xlu0
        %v2172 = vpop.trf.xlu0
        %v2173 = vpop.trf.xlu0
        %v2174 = vpop.trf.xlu0
        %v2175 = vpop.trf.xlu0
        %v2176 = vpop.trf.xlu0
        %v2177 = vpop.trf.xlu0
        %v2178 = vpop.trf.xlu0
        %v2179 = vpop.trf.xlu0
        %v2180 = vpop.trf.xlu0
        %v2181 = vpop.trf.xlu0
        %v2182 = vpop.trf.xlu0
        %v2183 = vpop.trf.xlu0
        %v2184 = vpop.trf.xlu0
        %v2185 = vpop.trf.xlu0
        %2186 = vxpose.xlu0.b32.start [1/16] %v2071, 128
        %2187 = vxpose.xlu0.b32.cont [2/16] 0.0, 128
        %2188 = vxpose.xlu0.b32.cont [3/16] 0.0, 128
        %2189 = vxpose.xlu0.b32.cont [4/16] 0.0, 128
        %2190 = vxpose.xlu0.b32.cont [5/16] 0.0, 128
        %2191 = vxpose.xlu0.b32.cont [6/16] 0.0, 128
        %2192 = vxpose.xlu0.b32.cont [7/16] 0.0, 128
        %2193 = vxpose.xlu0.b32.cont [8/16] 0.0, 128
        %2194 = vxpose.xlu0.b32.cont [9/16] 0.0, 128
        %2195 = vxpose.xlu0.b32.cont [10/16] 0.0, 128
        %2196 = vxpose.xlu0.b32.cont [11/16] 0.0, 128
        %2197 = vxpose.xlu0.b32.cont [12/16] 0.0, 128
        %2198 = vxpose.xlu0.b32.cont [13/16] 0.0, 128
        %2199 = vxpose.xlu0.b32.cont [14/16] 0.0, 128
        %2200 = vxpose.xlu0.b32.cont [15/16] 0.0, 128
        %2201 = vxpose.xlu0.b32.end [16/16] 0.0, 128
        %v2202 = vpop.trf.xlu0
        %v2203 = vpop.trf.xlu0
        %v2204 = vpop.trf.xlu0
        %v2205 = vpop.trf.xlu0
        %v2206 = vpop.trf.xlu0
        %v2207 = vpop.trf.xlu0
        %v2208 = vpop.trf.xlu0
        %v2209 = vpop.trf.xlu0
        %v2210 = vpop.trf.xlu0
        %v2211 = vpop.trf.xlu0
        %v2212 = vpop.trf.xlu0
        %v2213 = vpop.trf.xlu0
        %v2214 = vpop.trf.xlu0
        %v2215 = vpop.trf.xlu0
        %v2216 = vpop.trf.xlu0
        %v2217 = vpop.trf.xlu0
        %2218 = vxpose.xlu0.b32.start [1/16] %v2117, 128
        %2219 = vxpose.xlu0.b32.cont [2/16] 0.0, 128
        %2220 = vxpose.xlu0.b32.cont [3/16] 0.0, 128
        %2221 = vxpose.xlu0.b32.cont [4/16] 0.0, 128
        %2222 = vxpose.xlu0.b32.cont [5/16] 0.0, 128
        %2223 = vxpose.xlu0.b32.cont [6/16] 0.0, 128
        %2224 = vxpose.xlu0.b32.cont [7/16] 0.0, 128
        %2225 = vxpose.xlu0.b32.cont [8/16] 0.0, 128
        %2226 = vxpose.xlu0.b32.cont [9/16] 0.0, 128
        %2227 = vxpose.xlu0.b32.cont [10/16] 0.0, 128
        %2228 = vxpose.xlu0.b32.cont [11/16] 0.0, 128
        %2229 = vxpose.xlu0.b32.cont [12/16] 0.0, 128
        %2230 = vxpose.xlu0.b32.cont [13/16] 0.0, 128
        %2231 = vxpose.xlu0.b32.cont [14/16] 0.0, 128
        %2232 = vxpose.xlu0.b32.cont [15/16] 0.0, 128
        %2233 = vxpose.xlu0.b32.end [16/16] 0.0, 128
        %v2234 = vpop.trf.xlu0
        %v2235 = vpop.trf.xlu0
        %v2236 = vpop.trf.xlu0
        %v2237 = vpop.trf.xlu0
        %v2238 = vpop.trf.xlu0
        %v2239 = vpop.trf.xlu0
        %v2240 = vpop.trf.xlu0
        %v2241 = vpop.trf.xlu0
        %v2242 = vpop.trf.xlu0
        %v2243 = vpop.trf.xlu0
        %v2244 = vpop.trf.xlu0
        %v2245 = vpop.trf.xlu0
        %v2246 = vpop.trf.xlu0
        %v2247 = vpop.trf.xlu0
        %v2248 = vpop.trf.xlu0
        %v2249 = vpop.trf.xlu0
        %v2250 = vcombine.low %v2138, %v2202
        %v2251 = vcombine.high %v2138, %v2202
        %v2253 = vunpack.c.l.s4 1983009808
        %v2254 = vunpack.c.0.s8 %v2253
        %v2255 = vlaneseq
        %v2256 = vshrl.u32 %v2255, 7
        %v2257 = vsub.s32 %v2254, %v2256
        %v2258 = vrot.slane %v2250, %v2257
        %v2260 = vunpack.c.l.s4 1983009808
        %v2261 = vunpack.c.0.s8 %v2260
        %v2262 = vlaneseq
        %v2263 = vshrl.u32 %v2262, 7
        %v2264 = vsub.s32 %v2261, %v2263
        %v2265 = vrot.slane %v2251, %v2264
        %v2266 = vcombine.low %v2170, %v2234
        %v2267 = vcombine.high %v2170, %v2234
        %v2269 = vunpack.c.l.s4 1983009808
        %v2270 = vunpack.c.0.s8 %v2269
        %v2271 = vlaneseq
        %v2272 = vshrl.u32 %v2271, 7
        %v2273 = vsub.s32 %v2270, %v2272
        %v2274 = vrot.slane %v2266, %v2273
        %v2276 = vunpack.c.l.s4 1983009808
        %v2277 = vunpack.c.0.s8 %v2276
        %v2278 = vlaneseq
        %v2279 = vshrl.u32 %v2278, 7
        %v2280 = vsub.s32 %v2277, %v2279
        %v2281 = vrot.slane %v2267, %v2280
        %v2282 = vcombine.low %v2258, %v2274
        %v2283 = vcombine.high %v2258, %v2274
        %v2285 = vunpack.c.l.s4 1934713408
        %v2286 = vunpack.c.0.s8 %v2285
        %v2287 = vlaneseq
        %v2288 = vshrl.u32 %v2287, 7
        %v2289 = vsub.s32 %v2286, %v2288
        %v2290 = vrot.slane %v2282, %v2289
        %v2292 = vunpack.c.l.s4 1934713408
        %v2293 = vunpack.c.0.s8 %v2292
        %v2294 = vlaneseq
        %v2295 = vshrl.u32 %v2294, 7
        %v2296 = vsub.s32 %v2293, %v2295
        %v2297 = vrot.slane %v2283, %v2296
        %v2298 = vcombine.low %v2265, %v2281
        %v2299 = vcombine.high %v2265, %v2281
        %v2301 = vunpack.c.l.s4 1934713408
        %v2302 = vunpack.c.0.s8 %v2301
        %v2303 = vlaneseq
        %v2304 = vshrl.u32 %v2303, 7
        %v2305 = vsub.s32 %v2302, %v2304
        %v2306 = vrot.slane %v2298, %v2305
        %v2308 = vunpack.c.l.s4 1934713408
        %v2309 = vunpack.c.0.s8 %v2308
        %v2310 = vlaneseq
        %v2311 = vshrl.u32 %v2310, 7
        %v2312 = vsub.s32 %v2309, %v2311
        %v2313 = vrot.slane %v2299, %v2312
        %v2314 = vcombine.high %v2290, 0.0
        %v2315 = vcombine.high %v2297, 0.0
        %v2316 = vcombine.high %v2306, 0.0
        %v2317 = vcombine.high %v2313, 0.0
        %v2318 = vcombine.low %v2290, %v2297
        %v2320 = vunpack.c.l.s4 1983009808
        %v2321 = vunpack.c.0.s8 %v2320
        %v2322 = vlaneseq
        %v2323 = vshrl.u32 %v2322, 7
        %v2324 = vsub.s32 %v2321, %v2323
        %v2325 = vrot.slane %v2318, %v2324
        %v2326 = vcombine.low %v2314, %v2315
        %v2328 = vunpack.c.l.s4 1983009808
        %v2329 = vunpack.c.0.s8 %v2328
        %v2330 = vlaneseq
        %v2331 = vshrl.u32 %v2330, 7
        %v2332 = vsub.s32 %v2329, %v2331
        %v2333 = vrot.slane %v2326, %v2332
        %v2334 = vcombine.low %v2306, %v2313
        %v2336 = vunpack.c.l.s4 1983009808
        %v2337 = vunpack.c.0.s8 %v2336
        %v2338 = vlaneseq
        %v2339 = vshrl.u32 %v2338, 7
        %v2340 = vsub.s32 %v2337, %v2339
        %v2341 = vrot.slane %v2334, %v2340
        %v2342 = vcombine.low %v2316, %v2317
        %v2344 = vunpack.c.l.s4 1983009808
        %v2345 = vunpack.c.0.s8 %v2344
        %v2346 = vlaneseq
        %v2347 = vshrl.u32 %v2346, 7
        %v2348 = vsub.s32 %v2345, %v2347
        %v2349 = vrot.slane %v2342, %v2348
        %v2350 = vcombine.low %v2325, %v2333
        %v2351 = vcombine.high %v2325, %v2333
        %v2353 = vunpack.c.l.s4 1934713408
        %v2354 = vunpack.c.0.s8 %v2353
        %v2355 = vlaneseq
        %v2356 = vshrl.u32 %v2355, 7
        %v2357 = vsub.s32 %v2354, %v2356
        %v2358 = vrot.slane %v2350, %v2357
        %v2360 = vunpack.c.l.s4 1934713408
        %v2361 = vunpack.c.0.s8 %v2360
        %v2362 = vlaneseq
        %v2363 = vshrl.u32 %v2362, 7
        %v2364 = vsub.s32 %v2361, %v2363
        %v2365 = vrot.slane %v2351, %v2364
        %v2366 = vcombine.low %v2341, %v2349
        %v2367 = vcombine.high %v2341, %v2349
        %v2369 = vunpack.c.l.s4 1934713408
        %v2370 = vunpack.c.0.s8 %v2369
        %v2371 = vlaneseq
        %v2372 = vshrl.u32 %v2371, 7
        %v2373 = vsub.s32 %v2370, %v2372
        %v2374 = vrot.slane %v2366, %v2373
        %v2376 = vunpack.c.l.s4 1934713408
        %v2377 = vunpack.c.0.s8 %v2376
        %v2378 = vlaneseq
        %v2379 = vshrl.u32 %v2378, 7
        %v2380 = vsub.s32 %v2377, %v2379
        %v2381 = vrot.slane %v2367, %v2380
        %v2382 = vcombine.low %v2358, %v2374
        %v2383 = vcombine.high %v2358, %v2374
        %v2384 = vcombine.low %v2365, %v2381
        %v2385 = vcombine.high %v2365, %v2381
        %2387 = vrot.lane.b32.xlu0 %v2383, 8
        %v2388 = vpop.permute.xlu0 %2387
        %2391 = vrot.lane.b32.xlu0 %v2384, 16
        %v2392 = vpop.permute.xlu0 %2391
        %2395 = vrot.lane.b32.xlu0 %v2385, 24
        %v2396 = vpop.permute.xlu0 %2395
        %v2398 = vsel %vm1286, %v2382, %v2388
        %vm2399 = vcmask 130048
        %v2400 = vsel %vm2399, %v2398, %v2392
        %vm2401 = vcmask 195584
        %v2402 = vsel %vm2401, %v2400, %v2396
        %v2403 = vpack.c.bf16 %v2402, %v2402
        %v2404 = vld [vmem:[%s389] sm:$0xf]
        %v2405 = vld [vmem:[%s389 + $0x4] sm:$0xf]
        %v2406 = vld [vmem:[%s389 + $0x8] sm:$0xf]
        %v2407 = vld [vmem:[%s389 + $0xc] sm:$0xf]
        %v2408 = vlaneseq
        %v2409 = vshrl.u32 %v2408, 7
        %v2410 = vsub.s32 1, %v2409
        %v2411 = vrot.slane %v478, %v2410
        %v2416 = vunpack.c.l.b16 %v2404
        %v2417 = vunpack.c.l.b16 %v2405
        %v2418 = vunpack.c.l.b16 %v2406
        %v2419 = vunpack.c.l.b16 %v2407
        %v2420 = vpack.c.b16 %v2417, %v2416
        %v2421 = vpack.c.b16 %v2419, %v2418
        %v2425 = vsel %vm500, %v2403, 0
        %2427 = vmatprep.subr.bf16.mxu0 0
        %2428 = vmatpush1.bf16.msra.mxu0 %v2420
        %2429 = vmatprep.subr.bf16.mxu0 0
        %2430 = vmatpush1.bf16.msra.mxu0 %v2421
        %2431 = vmatprep.subr.bf16.mxu0 0
        %2432 = vmatpush1.bf16.msra.mxu0 0
        %2433 = vmatprep.subr.bf16.mxu0 0
        %2434 = vmatpush1.bf16.msra.mxu0 0
        %2435 = vmatprep.subr.bf16.mxu0 0
        %2436 = vmatpush1.bf16.msra.mxu0 0
        %2437 = vmatprep.subr.bf16.mxu0 0
        %2438 = vmatpush1.bf16.msra.mxu0 0
        %2439 = vmatprep.subr.bf16.mxu0 0
        %2440 = vmatpush1.bf16.msra.mxu0 0
        %2441 = vmatprep.subr.bf16.mxu0 0
        %2442 = vmatpush1.bf16.msra.mxu0 0
        %2443 = vmatprep.subr.bf16.mxu0 0
        %2444 = vmatpush1.bf16.msra.mxu0 0
        %2445 = vmatprep.subr.bf16.mxu0 0
        %2446 = vmatpush1.bf16.msra.mxu0 0
        %2447 = vmatprep.subr.bf16.mxu0 0
        %2448 = vmatpush1.bf16.msra.mxu0 0
        %2449 = vmatprep.subr.bf16.mxu0 0
        %2450 = vmatpush1.bf16.msra.mxu0 0
        %2451 = vmatprep.subr.bf16.mxu0 0
        %2452 = vmatpush1.bf16.msra.mxu0 0
        %2453 = vmatprep.subr.bf16.mxu0 0
        %2454 = vmatpush1.bf16.msra.mxu0 0
        %2455 = vmatprep.subr.bf16.mxu0 0
        %2456 = vmatpush1.bf16.msra.mxu0 0
        %2457 = vmatprep.subr.bf16.mxu0 0
        %2458 = vmatpush1.bf16.msra.mxu0 0
        %2459 = vmatprep.mubr.bf16.mxu0 0
        %2460 = vmatmul.mubr.bf16.gmra.mrb[0].mxu0 %v2425
        %v2461 = vpop.f32.mrb[0].mxu0
        %v2462 = vadd.f32 %v2411, %v2461
        %v2463 = vpop.f32.mrb[0].mxu0
        %v2464 = vpop.f32.mrb[0].mxu0
        %v2465 = vpop.f32.mrb[0].mxu0
        %2466 = vdwg.mxu0
        %v2467 = vadd.f32 %v2462, %v477
        %v2468 = vsel %vm500, %v2467, 0.0
        %2469 = vadd.xlane.f32.xlu0 %v2468
        %v2470 = vpop.xlane.xlu0 %2469
        %v2471 = vrcp.pop 32.0
        %v2472 = vmul.f32 %v2470, %v2471
        %v2473 = vsub.f32 %v2467, %v2472
        %v2474 = vmul.f32 %v2473, %v2473
        %v2475 = vsel %vm500, %v2474, 0.0
        %2476 = vadd.xlane.f32.xlu0 %v2475
        %v2477 = vpop.xlane.xlu0 %2476
        %v2478 = vmul.f32 %v2477, %v2471
        %v2479 = vadd.f32 %v2478, 1e-12
        %v2480 = vrsqrt.pop %v2479
        %v2481 = vmul.f32 %v2473, %v2480
        %v2482 = vlaneseq
        %v2483 = vshrl.u32 %v2482, 7
        %v2484 = vsub.s32 2, %v2483
        %v2485 = vrot.slane %v478, %v2484
        %v2486 = vmul.f32 %v2481, %v2485
        %v2487 = vlaneseq
        %v2488 = vshrl.u32 %v2487, 7
        %v2489 = vsub.s32 3, %v2488
        %v2490 = vrot.slane %v478, %v2489
        %v2491 = vadd.f32 %v2486, %v2490
        %v2492 = vpack.c.bf16 %v2491, %v2491
        %v2493 = vld [vmem:[%s398] sm:$0xf]
        %v2494 = vld [vmem:[%s398 + $0x4] sm:$0xf]
        %v2495 = vld [vmem:[%s398 + $0x8] sm:$0xf]
        %v2496 = vld [vmem:[%s398 + $0xc] sm:$0xf]
        %v2497 = vlaneseq
        %v2498 = vshrl.u32 %v2497, 7
        %v2499 = vsub.s32 4, %v2498
        %v2500 = vrot.slane %v478, %v2499
        %v2505 = vunpack.c.l.b16 %v2493
        %v2506 = vunpack.c.l.b16 %v2494
        %v2507 = vunpack.c.l.b16 %v2495
        %v2508 = vunpack.c.l.b16 %v2496
        %v2509 = vpack.c.b16 %v2506, %v2505
        %v2510 = vpack.c.b16 %v2508, %v2507
        %v2514 = vsel %vm500, %v2492, 0
        %2516 = vmatprep.subr.bf16.mxu0 0
        %2517 = vmatpush1.bf16.msra.mxu0 %v2509
        %2518 = vmatprep.subr.bf16.mxu0 0
        %2519 = vmatpush1.bf16.msra.mxu0 %v2510
        %2520 = vmatprep.subr.bf16.mxu0 0
        %2521 = vmatpush1.bf16.msra.mxu0 0
        %2522 = vmatprep.subr.bf16.mxu0 0
        %2523 = vmatpush1.bf16.msra.mxu0 0
        %2524 = vmatprep.subr.bf16.mxu0 0
        %2525 = vmatpush1.bf16.msra.mxu0 0
        %2526 = vmatprep.subr.bf16.mxu0 0
        %2527 = vmatpush1.bf16.msra.mxu0 0
        %2528 = vmatprep.subr.bf16.mxu0 0
        %2529 = vmatpush1.bf16.msra.mxu0 0
        %2530 = vmatprep.subr.bf16.mxu0 0
        %2531 = vmatpush1.bf16.msra.mxu0 0
        %2532 = vmatprep.subr.bf16.mxu0 0
        %2533 = vmatpush1.bf16.msra.mxu0 0
        %2534 = vmatprep.subr.bf16.mxu0 0
        %2535 = vmatpush1.bf16.msra.mxu0 0
        %2536 = vmatprep.subr.bf16.mxu0 0
        %2537 = vmatpush1.bf16.msra.mxu0 0
        %2538 = vmatprep.subr.bf16.mxu0 0
        %2539 = vmatpush1.bf16.msra.mxu0 0
        %2540 = vmatprep.subr.bf16.mxu0 0
        %2541 = vmatpush1.bf16.msra.mxu0 0
        %2542 = vmatprep.subr.bf16.mxu0 0
        %2543 = vmatpush1.bf16.msra.mxu0 0
        %2544 = vmatprep.subr.bf16.mxu0 0
        %2545 = vmatpush1.bf16.msra.mxu0 0
        %2546 = vmatprep.subr.bf16.mxu0 0
        %2547 = vmatpush1.bf16.msra.mxu0 0
        %2548 = vmatprep.mubr.bf16.mxu0 0
        %2549 = vmatmul.mubr.bf16.gmra.mrb[0].mxu0 %v2514
        %v2550 = vpop.f32.mrb[0].mxu0
        %v2551 = vadd.f32 %v2500, %v2550
        %v2552 = vpop.f32.mrb[0].mxu0
        %v2553 = vpop.f32.mrb[0].mxu0
        %v2554 = vpop.f32.mrb[0].mxu0
        %2555 = vdwg.mxu0
        %v2556 = vmul.f32 %v2551, 0.5
        %v2557 = vmul.f32 %v2551, 0.044715
        %v2558 = vmul.f32 %v2557, %v2551
        %v2559 = vmul.f32 %v2558, %v2551
        %v2560 = vadd.f32 %v2551, %v2559
        %v2561 = vmul.f32 %v2560, 0.7978846
        %v2562 = vtanh.pop %v2561
        %v2563 = vadd.f32 %v2562, 1.0
        %v2564 = vmul.f32 %v2556, %v2563
        %v2565 = vpack.c.bf16 %v2564, %v2564
        %v2566 = vld [vmem:[%s407] sm:$0xf]
        %v2567 = vld [vmem:[%s407 + $0x4] sm:$0xf]
        %v2568 = vld [vmem:[%s407 + $0x8] sm:$0xf]
        %v2569 = vld [vmem:[%s407 + $0xc] sm:$0xf]
        %v2570 = vld [vmem:[%s407 + $0x10] sm:$0xf]
        %v2571 = vld [vmem:[%s407 + $0x14] sm:$0xf]
        %v2572 = vld [vmem:[%s407 + $0x18] sm:$0xf]
        %v2573 = vld [vmem:[%s407 + $0x1c] sm:$0xf]
        %v2574 = vlaneseq
        %v2575 = vshrl.u32 %v2574, 7
        %v2576 = vsub.s32 5, %v2575
        %v2577 = vrot.slane %v478, %v2576
        %v2586 = vunpack.c.l.b16 %v2566
        %v2587 = vunpack.c.l.b16 %v2567
        %v2588 = vunpack.c.l.b16 %v2568
        %v2589 = vunpack.c.l.b16 %v2569
        %v2590 = vunpack.c.l.b16 %v2570
        %v2591 = vunpack.c.l.b16 %v2571
        %v2592 = vunpack.c.l.b16 %v2572
        %v2593 = vunpack.c.l.b16 %v2573
        %v2594 = vpack.c.b16 %v2587, %v2586
        %v2595 = vpack.c.b16 %v2589, %v2588
        %v2596 = vpack.c.b16 %v2591, %v2590
        %v2597 = vpack.c.b16 %v2593, %v2592
        %vm2602 = vcmask 523264
        %v2604 = vsel %vm2602, %v2565, 0
        %2606 = vmatprep.subr.bf16.mxu0 0
        %2607 = vmatpush1.bf16.msra.mxu0 %v2594
        %2608 = vmatprep.subr.bf16.mxu0 0
        %2609 = vmatpush1.bf16.msra.mxu0 %v2595
        %2610 = vmatprep.subr.bf16.mxu0 0
        %2611 = vmatpush1.bf16.msra.mxu0 %v2596
        %2612 = vmatprep.subr.bf16.mxu0 0
        %2613 = vmatpush1.bf16.msra.mxu0 %v2597
        %2614 = vmatprep.subr.bf16.mxu0 0
        %2615 = vmatpush1.bf16.msra.mxu0 0
        %2616 = vmatprep.subr.bf16.mxu0 0
        %2617 = vmatpush1.bf16.msra.mxu0 0
        %2618 = vmatprep.subr.bf16.mxu0 0
        %2619 = vmatpush1.bf16.msra.mxu0 0
        %2620 = vmatprep.subr.bf16.mxu0 0
        %2621 = vmatpush1.bf16.msra.mxu0 0
        %2622 = vmatprep.subr.bf16.mxu0 0
        %2623 = vmatpush1.bf16.msra.mxu0 0
        %2624 = vmatprep.subr.bf16.mxu0 0
        %2625 = vmatpush1.bf16.msra.mxu0 0
        %2626 = vmatprep.subr.bf16.mxu0 0
        %2627 = vmatpush1.bf16.msra.mxu0 0
        %2628 = vmatprep.subr.bf16.mxu0 0
        %2629 = vmatpush1.bf16.msra.mxu0 0
        %2630 = vmatprep.subr.bf16.mxu0 0
        %2631 = vmatpush1.bf16.msra.mxu0 0
        %2632 = vmatprep.subr.bf16.mxu0 0
        %2633 = vmatpush1.bf16.msra.mxu0 0
        %2634 = vmatprep.subr.bf16.mxu0 0
        %2635 = vmatpush1.bf16.msra.mxu0 0
        %2636 = vmatprep.subr.bf16.mxu0 0
        %2637 = vmatpush1.bf16.msra.mxu0 0
        %2638 = vmatprep.mubr.bf16.mxu0 0
        %2639 = vmatmul.mubr.bf16.gmra.mrb[0].mxu0 %v2604
        %v2640 = vpop.f32.mrb[0].mxu0
        %v2641 = vadd.f32 %v2577, %v2640
        %v2642 = vpop.f32.mrb[0].mxu0
        %v2643 = vpop.f32.mrb[0].mxu0
        %v2644 = vpop.f32.mrb[0].mxu0
        %2645 = vdwg.mxu0
        %v2646 = vadd.f32 %v2641, %v2491
        %v2647 = vsel %vm500, %v2646, 0.0
        %2648 = vadd.xlane.f32.xlu0 %v2647
        %v2649 = vpop.xlane.xlu0 %2648
        %v2650 = vmul.f32 %v2649, %v2471
        %v2651 = vsub.f32 %v2646, %v2650
        %v2652 = vmul.f32 %v2651, %v2651
        %v2653 = vsel %vm500, %v2652, 0.0
        %2654 = vadd.xlane.f32.xlu0 %v2653
        %v2655 = vpop.xlane.xlu0 %2654
        %v2656 = vmul.f32 %v2655, %v2471
        %v2657 = vadd.f32 %v2656, 1e-12
        %v2658 = vrsqrt.pop %v2657
        %v2659 = vmul.f32 %v2651, %v2658
        %v2660 = vlaneseq
        %v2661 = vshrl.u32 %v2660, 7
        %v2662 = vsub.s32 6, %v2661
        %v2663 = vrot.slane %v478, %v2662
        %v2664 = vmul.f32 %v2659, %v2663
        %v2665 = vlaneseq
        %v2666 = vshrl.u32 %v2665, 7
        %v2667 = vsub.s32 7, %v2666
        %v2668 = vrot.slane %v478, %v2667
        %v2669 = vadd.f32 %v2664, %v2668
        %2670 = vst.msk [vmem:[#allocation2] sm:$0xff] %vm500, %v2669
        %p2671 = scmp.eq.s32.totalorder %s37, 1
        // Predicated region
        $region73: #{tpu_custom_call.1} parent=43 // pred_check
          %p2672 = pneg %p2671
        $region74: #{tpu_custom_call.1} parent=43 // pred_check_branch
          %2674 = sbr.rel (%p2672) target = $region76
        $region75: #{tpu_custom_call.1} parent=43 // pred_region
          %vm2675 = vcmask 253952
          %2676 = vst.msk [vmem:[%s468] sm:$0x1] %vm2675, %v2669
        $region76: #{tpu_custom_call.1} parent=43 // pred_fallthru
          _
        %s2677 = sand.u32 %s208, 1
        %s2678 = scalar_lea.sflag [#allocation5], %s2677
        %s2679 = sand.u32 %s208, 1
        %s2680 = scalar_lea.vmem [#allocation14], %s2679
        // Predicated region
        $region77: #{tpu_custom_call.1} parent=43 // pred_check
          %p2681 = pneg %p218
        $region78: #{tpu_custom_call.1} parent=43 // pred_check_branch
          %2683 = sbr.rel (%p2681) target = $region80
        $region79: #{tpu_custom_call.1} parent=43 // pred_region
          %s2685 = ssub.s32 16, 16
          %2686 = vsyncadd %s2678, %s2685
          %s2687 = smul.addr %s36, 16
          %s2688 = scalar_lea.hbm %s6, %s2687
          %s2690 = sshll.u32 %s2680, 4
          %s2691 = int_to_ptr.vmem [resolvable:$true] %s2690
          %2693 = dma.vmem_to_hbm [thread:$0]  %s2691, 16, %s2688, %s2678
        $region80: #{tpu_custom_call.1} parent=43 // pred_fallthru
          _
      $region44: #{tpu_custom_call.1} parent=5 // pred_fallthru
        _
      %p2694 = scmp.le.s32.totalorder 2, %s27
      // Predicated region
      $region81: #{tpu_custom_call.1} parent=5 // pred_check
        %p2695 = pneg %p2694
      $region82: #{tpu_custom_call.1} parent=5 // pred_check_branch
        %2697 = sbr.rel (%p2695) target = $region84
      $region83: #{tpu_custom_call.1} parent=5 // pred_region
        %s2698 = ssub.s32 %s27, 2
        // Predicated region
        $region85: #{tpu_custom_call.1} parent=83 // pred_check
          %p2699 = pneg %p224
        $region86: #{tpu_custom_call.1} parent=83 // pred_check_branch
          %2701 = sbr.rel (%p2699) target = $region88
        $region87: #{tpu_custom_call.1} parent=83 // pred_region
          %s2702 = sand.u32 %s209, 1
          %s2703 = scalar_lea.sflag [#allocation5], %s2702
          %s2704 = sand.u32 %s209, 1
          %s2705 = scalar_lea.vmem [#allocation14], %s2704
          %2706 = dma.done %s2703, 16
        $region88: #{tpu_custom_call.1} parent=83 // pred_fallthru
          _
      $region84: #{tpu_custom_call.1} parent=5 // pred_fallthru
        _
    $region6: #{tpu_custom_call.1} parent=1 // loop_footer
      %s31 = sadd.s32 1, %s27
    $region7: #{tpu_custom_call.1} parent=1 // loop_footer_branch
      %26 = sbr.rel target = $region3
    $region8: #{tpu_custom_call.1} parent=1 // loop_exit
      _
    %2707 = vsyncpa [#allocation4], 1
    %s2708 = scalar_lea.sflag [#allocation4], 1
    %2709 = vsyncpa %s2708, 1
    %2710 = vsyncpa [#allocation7], 1
    %s2711 = scalar_lea.sflag [#allocation7], 1
    %2712 = vsyncpa %s2711, 1
    %2713 = vsyncpa [#allocation10], 1
    %s2714 = scalar_lea.sflag [#allocation10], 1
    %2715 = vsyncpa %s2714, 1
    %2716 = vsyncpa [#allocation13], 1
    %s2717 = scalar_lea.sflag [#allocation13], 1
    %2718 = vsyncpa %s2717, 1
    %2719 = vsyncpa [#allocation5], 1
    %s2720 = scalar_lea.sflag [#allocation5], 1
    %2721 = vsyncpa %s2720, 1

</llo_original>
